<compile_context>
chip_gen: v5e
topology: v5e:2x2
jax: 0.10.0
libtpu: 0.0.40
codegen_flags: <defaults>
</compile_context>

<pallas_src>
import functools
import math

import jax
import jax.numpy as jnp
from jax import lax
from jax.experimental import pallas as pl
from jax.experimental.pallas import tpu as pltpu


# ----------------------------------------------------------------------------
# helpers
# ----------------------------------------------------------------------------
def _round_up(n, m):
    return ((n + m - 1) // m) * m


def _pick_token_tile(m_tokens, max_tm=256):
    """Row tile: multiple of 8, <= max_tm.  No wrapper padding — grid uses cdiv
    and the ragged edge block's writeback is masked by Pallas."""
    return min(max_tm, _round_up(m_tokens, 8))


def _pick_f_tile(f, max_tf=2048):
    """F-reduction tile for the FFN.  Must divide F exactly (garbage lanes in a
    ragged *reduction* block would corrupt the accumulator)."""
    if f <= max_tf:
        return f
    for tf in range(max_tf, 127, -128):
        if f % tf == 0:
            return tf
    return f  # no multiple-of-128 divisor <= max_tf: fall back to one F block


def _gelu_exact(x):
    # matches torch: x * 0.5 * (1 + erf(x / sqrt(2)))
    return x * 0.5 * (1.0 + lax.erf(x * (1.0 / math.sqrt(2.0))))


def _layer_norm_epilogue(y, gamma, beta, eps):
    """torch-style LN: (x - mean) / (unbiased std + eps).  y is f32 (rows, H)."""
    h = y.shape[-1]
    mean = jnp.mean(y, axis=-1, keepdims=True)
    centered = y - mean
    var = jnp.sum(centered * centered, axis=-1, keepdims=True) * (1.0 / (h - 1))
    std = jnp.sqrt(var)
    return gamma * centered / (std + eps) + beta


def _compiler_params(dims, vmem_need_bytes):
    """Raise the scoped-VMEM limit only when needed, clamped to physical VMEM."""
    kwargs = dict(dimension_semantics=dims)
    scoped_default = 32 * 1024 * 1024
    if vmem_need_bytes > scoped_default:
        try:
            cap = int(pltpu.get_tpu_info().vmem_capacity_bytes)
        except Exception:  # conservative fallback (v7x-sized)
            cap = 64 * 1024 * 1024
        kwargs["vmem_limit_bytes"] = max(
            scoped_default,
            min(int(1.25 * vmem_need_bytes), cap - 4 * 1024 * 1024))
    return pltpu.CompilerParams(**kwargs)


# ----------------------------------------------------------------------------
# kernel 1: multi-headed self-attention + fused residual-add + LayerNorm1
#   grid = (batch, query tiles); K/V cached in VMEM scratch per batch element
# ----------------------------------------------------------------------------
def mha_ln_kernel(xq_ref, xkv_ref, mask_ref, wqkv_ref, bqkv_ref, wo_ref, bo_ref,
                  gamma_ref, beta_ref, o_ref, k_scratch, v_scratch,
                  *, heads, scale, eps):
    h_size = xq_ref.shape[-1]
    d = h_size // heads
    dt = xq_ref.dtype

    # Project K/V for the whole sequence once per batch element (first q tile)
    # and cache in VMEM scratch.  The qi grid axis is "arbitrary" (sequential),
    # so this carry is legal.
    @pl.when(pl.program_id(1) == 0)
    def _():
        w_kv = wqkv_ref[...][:, h_size:]
        b_kv = bqkv_ref[...][:, h_size:]
        kv = jnp.dot(xkv_ref[...], w_kv, preferred_element_type=jnp.float32) + b_kv
        k_scratch[...] = kv[:, :h_size].astype(dt)
        v_scratch[...] = kv[:, h_size:].astype(dt)

    xq = xq_ref[...]                                       # (tq, H) — also LN1 residual
    w_q = wqkv_ref[...][:, :h_size]
    b_q = bqkv_ref[...][:, :h_size]
    q = jnp.dot(xq, w_q, preferred_element_type=jnp.float32) + b_q
    # Fold 1/sqrt(d) into q once (O(tq*H), not O(tq*S) per head) and feed the
    # MXU its native input dtype (bf16 stays bf16) with f32 accumulation.
    q = (q * scale).astype(dt)
    k = k_scratch[...]
    v = v_scratch[...]
    m = mask_ref[...].astype(jnp.float32)                  # (tq, S) additive mask

    # TODO(synk): on v6e/v7x (256-wide MXU) pack >=2 heads per score/context
    # matmul when d < 256; on many-head v5e switch this static loop to
    # lax.fori_loop to bound vreg live ranges.
    ctx_parts = []
    for hh in range(heads):
        lo = hh * d
        qh = q[:, lo:lo + d]
        kh = k[:, lo:lo + d]
        vh = v[:, lo:lo + d]
        # contract last dims of both operands — no materialized transpose.
        s = lax.dot_general(qh, kh, (((1,), (1,)), ((), ())),
                            preferred_element_type=jnp.float32) + m
        s = s - jnp.max(s, axis=-1, keepdims=True)
        p = jnp.exp(s)
        # EUP approximate reciprocal for the softmax denominator (frees VALU).
        p = p * pl.reciprocal(jnp.sum(p, axis=-1, keepdims=True), approx=True)
        ctx_parts.append(
            jnp.dot(p.astype(dt), vh, preferred_element_type=jnp.float32))

    # One lane-concatenated context and a single output-projection matmul.
    ctx = jnp.concatenate(ctx_parts, axis=-1).astype(dt)   # (tq, H)
    attn = jnp.dot(ctx, wo_ref[...],
                   preferred_element_type=jnp.float32) + bo_ref[...]

    # Fused residual-add + LayerNorm1 epilogue (residual tile already in VMEM).
    y = attn + xq.astype(jnp.float32)
    o_ref[...] = _layer_norm_epilogue(
        y, gamma_ref[...], beta_ref[...], eps).astype(o_ref.dtype)


def mha_add_layernorm(x, mask, wqkv, bqkv, wo, bo, gamma, beta, *,
                      heads, eps=1e-6, tq_max=256):
    B, S, H = x.shape
    assert H % heads == 0, "heads_num must divide hidden_size"
    d = H // heads
    scale = 1.0 / math.sqrt(float(d))

    tq = _pick_token_tile(S, tq_max)
    nq = pl.cdiv(S, tq)

    it = jnp.dtype(x.dtype).itemsize
    mit = jnp.dtype(mask.dtype).itemsize
    vmem_need = (2 * (3 * H * H + H * H + 4 * H) * it       # resident weights/biases (2-buf)
                 + 2 * (2 * tq * H + S * H) * it            # xq, out, xkv tiles
                 + 2 * tq * S * mit                         # mask tile
                 + 2 * S * H * it                           # K/V scratch
                 + 4 * (2 * tq * H + tq * S + 2 * S * H))   # f32 temporaries
    flops = B * (2 * S * H * 3 * H + heads * 4 * S * S * d + 2 * S * H * H)
    bytes_accessed = (2 * B * S * H + 4 * H * H + 7 * H) * it + B * S * S * mit

    kernel = functools.partial(mha_ln_kernel, heads=heads, scale=scale, eps=eps)
    const = lambda b, qi: (0, 0)

    # TODO(synk): the (tq,S) mask slice is streamed per grid step because the
    # module's mask is batch-dependent; for a batch-invariant/causal mask it
    # should be generated in-kernel (broadcasted_iota + where) to save bandwidth.
    out = pl.pallas_call(
        kernel,
        out_shape=jax.ShapeDtypeStruct((B, S, H), x.dtype),
        grid_spec=pltpu.PrefetchScalarGridSpec(
            num_scalar_prefetch=0,
            grid=(B, nq),
            in_specs=[
                pl.BlockSpec((None, tq, H), lambda b, qi: (b, qi, 0)),        # q rows + residual
                pl.BlockSpec((None, S, H), lambda b, qi: (b, 0, 0)),          # K/V source (full seq)
                pl.BlockSpec((None, None, tq, S), lambda b, qi: (b, 0, qi, 0)),  # mask slice
                pl.BlockSpec((H, 3 * H), const),                               # fused Wqkv
                pl.BlockSpec((1, 3 * H), const),                               # fused bqkv
                pl.BlockSpec((H, H), const),                                   # Wo
                pl.BlockSpec((1, H), const),                                   # bo
                pl.BlockSpec((1, H), const),                                   # gamma1
                pl.BlockSpec((1, H), const),                                   # beta1
            ],
            out_specs=pl.BlockSpec((None, tq, H), lambda b, qi: (b, qi, 0)),
            scratch_shapes=[pltpu.VMEM((S, H), x.dtype),                       # K cache
                            pltpu.VMEM((S, H), x.dtype)],                      # V cache
        ),
        compiler_params=_compiler_params(("parallel", "arbitrary"), vmem_need),
        cost_estimate=pl.CostEstimate(
            flops=flops, transcendentals=B * heads * S * S,
            bytes_accessed=bytes_accessed),
    )(x, x, mask, wqkv, bqkv.reshape(1, 3 * H), wo, bo.reshape(1, H),
      gamma.reshape(1, H), beta.reshape(1, H))
    return out


# ----------------------------------------------------------------------------
# kernel 2: position-wise FFN (F-reduction axis) + fused residual + LayerNorm2
# ----------------------------------------------------------------------------
def ffn_ln_kernel(x_ref, w1_ref, b1_ref, w2_ref, b2_ref, gamma_ref, beta_ref,
                  o_ref, acc_ref, *, eps):
    fi = pl.program_id(1)

    @pl.when(fi == 0)
    def _():
        acc_ref[...] = jnp.zeros_like(acc_ref)

    x = x_ref[...]                                          # (tm, H) — also LN2 residual
    h = jnp.dot(x, w1_ref[...], preferred_element_type=jnp.float32) + b1_ref[...]
    h = _gelu_exact(h)                                      # exact erf GELU
    acc_ref[...] += jnp.dot(h.astype(x.dtype), w2_ref[...],
                            preferred_element_type=jnp.float32)

    @pl.when(fi == pl.num_programs(1) - 1)
    def _():
        # fused bias + residual-add + LayerNorm2 epilogue.
        y = acc_ref[...] + b2_ref[...] + x.astype(jnp.float32)
        o_ref[...] = _layer_norm_epilogue(
            y, gamma_ref[...], beta_ref[...], eps).astype(o_ref.dtype)


def ffn_add_layernorm(x, w1, b1, w2, b2, gamma, beta, *, eps=1e-6,
                      tm_max=256, tf_max=2048):
    B, S, H = x.shape
    F = w1.shape[1]
    M = B * S

    tm = _pick_token_tile(M, tm_max)
    tf = _pick_f_tile(F, tf_max)
    nm = pl.cdiv(M, tm)
    nf = F // tf

    x2 = x.reshape(M, H)            # contiguous reshape: no HBM copy, no pad/slice

    it = jnp.dtype(x.dtype).itemsize
    vmem_need = (2 * (H * tf + tf * H + tf + 3 * H) * it    # streamed W1/W2 tiles + vectors
                 + 2 * (2 * tm * H) * it                    # x / out tiles (2-buf)
                 + 4 * tm * H                               # f32 accumulator scratch
                 + 4 * (tm * tf + 2 * tm * H))              # f32 GELU + epilogue temporaries
    flops = 4 * M * H * F
    bytes_accessed = (2 * M * H + 2 * H * F + F + 3 * H) * it

    kernel = functools.partial(ffn_ln_kernel, eps=eps)
    out = pl.pallas_call(
        kernel,
        out_shape=jax.ShapeDtypeStruct((M, H), x.dtype),
        grid_spec=pltpu.PrefetchScalarGridSpec(
            num_scalar_prefetch=0,
            grid=(nm, nf),
            in_specs=[
                pl.BlockSpec((tm, H), lambda i, f: (i, 0)),     # x tile (resident over f)
                pl.BlockSpec((H, tf), lambda i, f: (0, f)),     # W1 column tile (streamed)
                pl.BlockSpec((1, tf), lambda i, f: (0, f)),     # b1 tile
                pl.BlockSpec((tf, H), lambda i, f: (f, 0)),     # W2 row tile (streamed)
                pl.BlockSpec((1, H), lambda i, f: (0, 0)),      # b2
                pl.BlockSpec((1, H), lambda i, f: (0, 0)),      # gamma2
                pl.BlockSpec((1, H), lambda i, f: (0, 0)),      # beta2
            ],
            out_specs=pl.BlockSpec((tm, H), lambda i, f: (i, 0)),
            scratch_shapes=[pltpu.VMEM((tm, H), jnp.float32)],  # f32 accumulator
        ),
        compiler_params=_compiler_params(("parallel", "arbitrary"), vmem_need),
        cost_estimate=pl.CostEstimate(
            flops=flops, transcendentals=M * F, bytes_accessed=bytes_accessed),
    )(x2, w1, b1.reshape(1, F), w2, b2.reshape(1, H),
      gamma.reshape(1, H), beta.reshape(1, H))
    return out.reshape(B, S, H)


# ----------------------------------------------------------------------------
# full transformer layer
# ----------------------------------------------------------------------------
def transformer_layer(hidden, mask, params, *, heads, eps=1e-6):
    # TODO(synk): dropout_1 / dropout_2 / attention dropout are identity (eval
    # mode); training-mode dropout would use pltpu.prng_seed / prng_random_bits.
    H = hidden.shape[-1]
    # Fuse Q/K/V projections into one (H, 3H) weight (one resident buffer, one
    # weight stream); in production these would be stored pre-fused.
    wqkv = jnp.concatenate([params["wq"], params["wk"], params["wv"]], axis=1)
    bqkv = jnp.concatenate([params["bq"], params["bk"], params["bv"]], axis=0)

    inter = mha_add_layernorm(
        hidden, mask, wqkv, bqkv, params["wo"], params["bo"],
        params["gamma1"], params["beta1"], heads=heads, eps=eps)
    out = ffn_add_layernorm(
        inter, params["w1"], params["b1"], params["w2"], params["b2"],
        params["gamma2"], params["beta2"], eps=eps)
    return out


# ----------------------------------------------------------------------------
# pure-JAX reference (mirrors the torch module, eval mode)
# ----------------------------------------------------------------------------
def _reference(hidden, mask, p, heads, eps=1e-6):
    B, S, H = hidden.shape
    d = H // heads

    def linear(x, w, b):
        return jnp.dot(x, w) + b

    def heads_split(x):
        return x.reshape(B, S, heads, d).transpose(0, 2, 1, 3)

    q = heads_split(linear(hidden, p["wq"], p["bq"]))
    k = heads_split(linear(hidden, p["wk"], p["bk"]))
    v = heads_split(linear(hidden, p["wv"], p["bv"]))
    scores = jnp.einsum("bhqd,bhkd->bhqk", q, k) / math.sqrt(float(d)) + mask
    probs = jax.nn.softmax(scores, axis=-1)
    ctx = jnp.einsum("bhqk,bhkd->bhqd", probs, v).transpose(0, 2, 1, 3).reshape(B, S, H)
    attn = linear(ctx, p["wo"], p["bo"])

    def layer_norm(x, gamma, beta):
        mean = x.mean(-1, keepdims=True)
        var = ((x - mean) ** 2).sum(-1, keepdims=True) / (H - 1)
        std = jnp.sqrt(var)
        return gamma * (x - mean) / (std + eps) + beta

    inter = layer_norm(attn + hidden, p["gamma1"], p["beta1"])
    h = jnp.dot(inter, p["w1"]) + p["b1"]
    h = h * 0.5 * (1.0 + lax.erf(h / math.sqrt(2.0)))
    ffn = jnp.dot(h, p["w2"]) + p["b2"]
    return layer_norm(ffn + inter, p["gamma2"], p["beta2"])


if __name__ == "__main__":
    batch, seq, hidden_size, heads_num, ffn_size = 2, 8, 32, 4, 64

    key = jax.random.PRNGKey(0)
    keys = jax.random.split(key, 16)

    x = jax.random.normal(keys[0], (batch, seq, hidden_size), dtype=jnp.float32)

    # additive attention mask: 0 where visible, -10000 where masked (causal)
    causal = jnp.tril(jnp.ones((seq, seq), dtype=jnp.float32))
    mask = jnp.where(causal[None, None] > 0, 0.0, -10000.0)
    mask = jnp.broadcast_to(mask, (batch, 1, seq, seq)).astype(jnp.float32)

    def uni(k, shape, lim):
        return jax.random.uniform(k, shape, minval=-lim, maxval=lim, dtype=jnp.float32)

    limH = 1.0 / math.sqrt(hidden_size)
    limF = 1.0 / math.sqrt(ffn_size)

    # Weights are stored (in, out) — already transposed relative to torch Linear.
    params = {
        "wq": uni(keys[1], (hidden_size, hidden_size), limH),
        "bq": uni(keys[2], (hidden_size,), limH),
        "wk": uni(keys[3], (hidden_size, hidden_size), limH),
        "bk": uni(keys[4], (hidden_size,), limH),
        "wv": uni(keys[5], (hidden_size, hidden_size), limH),
        "bv": uni(keys[6], (hidden_size,), limH),
        "wo": uni(keys[7], (hidden_size, hidden_size), limH),
        "bo": uni(keys[8], (hidden_size,), limH),
        "gamma1": jnp.ones((hidden_size,), jnp.float32),
        "beta1": jnp.zeros((hidden_size,), jnp.float32),
        "w1": uni(keys[9], (hidden_size, ffn_size), limH),
        "b1": uni(keys[10], (ffn_size,), limH),
        "w2": uni(keys[11], (ffn_size, hidden_size), limF),
        "b2": uni(keys[12], (hidden_size,), limF),
        "gamma2": jnp.ones((hidden_size,), jnp.float32),
        "beta2": jnp.zeros((hidden_size,), jnp.float32),
    }

    out = transformer_layer(x, mask, params, heads=heads_num)
    out = jax.block_until_ready(out)

    ref = _reference(x, mask, params, heads_num)
    assert out.shape == (batch, seq, hidden_size)
    # tolerance allows for the EUP approximate reciprocal in the softmax denom
    assert jnp.allclose(out, ref, atol=2e-3, rtol=2e-3), "mismatch vs reference"

    print("KERNEL_OK")
</pallas_src>

<mosaic_0001>
module attributes {stable_mosaic.version = 11 : i64} {
  func.func @mha_ln_kernel(%arg0: i32, %arg1: i32, %arg2: memref<1x8x32xf32, #tpu.memory_space<vmem>>, %arg3: memref<1x8x32xf32, #tpu.memory_space<vmem>>, %arg4: memref<1x1x8x8xf32, #tpu.memory_space<vmem>>, %arg5: memref<32x96xf32, #tpu.memory_space<vmem>>, %arg6: memref<1x96xf32, #tpu.memory_space<vmem>>, %arg7: memref<32x32xf32, #tpu.memory_space<vmem>>, %arg8: memref<1x32xf32, #tpu.memory_space<vmem>>, %arg9: memref<1x32xf32, #tpu.memory_space<vmem>>, %arg10: memref<1x32xf32, #tpu.memory_space<vmem>>, %arg11: memref<1x8x32xf32, #tpu.memory_space<vmem>>, %arg12: memref<8x32xf32, #tpu.memory_space<vmem>>, %arg13: memref<8x32xf32, #tpu.memory_space<vmem>>) attributes {dimension_semantics = [#tpu.dimension_semantics<parallel>, #tpu.dimension_semantics<arbitrary>], iteration_bounds = array<i64: 2, 1>, scalar_prefetch = 0 : i64, scratch_operands = 2 : i64, tpu.core_type = #tpu.core_type<tc>, window_params = [{transform_indices = @transform_0, window_bounds = array<i64: 1, 8, 32>}, {transform_indices = @transform_1, window_bounds = array<i64: 1, 8, 32>}, {transform_indices = @transform_2, window_bounds = array<i64: 1, 1, 8, 8>}, {pipeline_mode = #tpu.pipeline_mode<synchronous>, transform_indices = @transform_3, window_bounds = array<i64: 32, 96>}, {pipeline_mode = #tpu.pipeline_mode<synchronous>, transform_indices = @transform_4, window_bounds = array<i64: 1, 96>}, {pipeline_mode = #tpu.pipeline_mode<synchronous>, transform_indices = @transform_5, window_bounds = array<i64: 32, 32>}, {pipeline_mode = #tpu.pipeline_mode<synchronous>, transform_indices = @transform_6, window_bounds = array<i64: 1, 32>}, {pipeline_mode = #tpu.pipeline_mode<synchronous>, transform_indices = @transform_7, window_bounds = array<i64: 1, 32>}, {pipeline_mode = #tpu.pipeline_mode<synchronous>, transform_indices = @transform_8, window_bounds = array<i64: 1, 32>}, {transform_indices = @transform_9, window_bounds = array<i64: 1, 8, 32>}]} {
    %c0_i32 = arith.constant 0 : i32
    %0 = arith.cmpi eq, %arg1, %c0_i32 : i32
    %1 = arith.extui %0 : i1 to i32
    %c0_i32_0 = arith.constant 0 : i32
    %2 = arith.cmpi ne, %1, %c0_i32_0 : i32
    scf.if %2 {
      %c0_49 = arith.constant 0 : index
      %c0_50 = arith.constant 0 : index
      %114 = vector.load %arg5[%c0_49, %c0_50] : memref<32x96xf32, #tpu.memory_space<vmem>>, vector<32x96xf32>
      %115 = vector.extract_strided_slice %114 {offsets = [0, 32], sizes = [32, 64], strides = [1, 1]} : vector<32x96xf32> to vector<32x64xf32>
      %c0_51 = arith.constant 0 : index
      %c0_52 = arith.constant 0 : index
      %116 = vector.load %arg6[%c0_51, %c0_52] : memref<1x96xf32, #tpu.memory_space<vmem>>, vector<1x96xf32>
      %117 = vector.extract_strided_slice %116 {offsets = [0, 32], sizes = [1, 64], strides = [1, 1]} : vector<1x96xf32> to vector<1x64xf32>
      %c0_53 = arith.constant 0 : index
      %c0_54 = arith.constant 0 : index
      %c0_55 = arith.constant 0 : index
      %118 = vector.load %arg3[%c0_53, %c0_54, %c0_55] : memref<1x8x32xf32, #tpu.memory_space<vmem>>, vector<1x8x32xf32>
      %119 = vector.shape_cast %118 : vector<1x8x32xf32> to vector<8x32xf32>
      %cst_56 = arith.constant dense<0.000000e+00> : vector<8x64xf32>
      %120 = tpu.matmul %119, %115, %cst_56 {dimension_numbers = #tpu.dot_dimension_numbers<[1], [0], [0], [1], [0, 0, 1, 1], [], []>} : vector<8x32xf32>, vector<32x64xf32>, vector<8x64xf32> -> vector<8x64xf32>
      %121 = vector.broadcast %117 : vector<1x64xf32> to vector<8x64xf32>
      %122 = arith.addf %120, %121 : vector<8x64xf32>
      %123 = vector.extract_strided_slice %122 {offsets = [0, 0], sizes = [8, 32], strides = [1, 1]} : vector<8x64xf32> to vector<8x32xf32>
      %c0_57 = arith.constant 0 : index
      %c0_58 = arith.constant 0 : index
      %124 = vector.load %arg12[%c0_57, %c0_58] : memref<8x32xf32, #tpu.memory_space<vmem>>, vector<8x32xf32>
      tpu.vector_store %arg12[%c0_57, %c0_58], %123 {strides = array<i32>} : memref<8x32xf32, #tpu.memory_space<vmem>>, vector<8x32xf32>,
      %125 = vector.extract_strided_slice %122 {offsets = [0, 32], sizes = [8, 32], strides = [1, 1]} : vector<8x64xf32> to vector<8x32xf32>
      %c0_59 = arith.constant 0 : index
      %c0_60 = arith.constant 0 : index
      %126 = vector.load %arg13[%c0_59, %c0_60] : memref<8x32xf32, #tpu.memory_space<vmem>>, vector<8x32xf32>
      tpu.vector_store %arg13[%c0_59, %c0_60], %125 {strides = array<i32>} : memref<8x32xf32, #tpu.memory_space<vmem>>, vector<8x32xf32>,
    } else {
    }
    %c0 = arith.constant 0 : index
    %c0_1 = arith.constant 0 : index
    %c0_2 = arith.constant 0 : index
    %3 = vector.load %arg2[%c0, %c0_1, %c0_2] : memref<1x8x32xf32, #tpu.memory_space<vmem>>, vector<1x8x32xf32>
    %4 = vector.shape_cast %3 : vector<1x8x32xf32> to vector<8x32xf32>
    %c0_3 = arith.constant 0 : index
    %c0_4 = arith.constant 0 : index
    %5 = vector.load %arg5[%c0_3, %c0_4] : memref<32x96xf32, #tpu.memory_space<vmem>>, vector<32x96xf32>
    %6 = vector.extract_strided_slice %5 {offsets = [0, 0], sizes = [32, 32], strides = [1, 1]} : vector<32x96xf32> to vector<32x32xf32>
    %c0_5 = arith.constant 0 : index
    %c0_6 = arith.constant 0 : index
    %7 = vector.load %arg6[%c0_5, %c0_6] : memref<1x96xf32, #tpu.memory_space<vmem>>, vector<1x96xf32>
    %8 = vector.extract_strided_slice %7 {offsets = [0, 0], sizes = [1, 32], strides = [1, 1]} : vector<1x96xf32> to vector<1x32xf32>
    %cst = arith.constant dense<0.000000e+00> : vector<8x32xf32>
    %9 = tpu.matmul %4, %6, %cst {dimension_numbers = #tpu.dot_dimension_numbers<[1], [0], [0], [1], [0, 0, 1, 1], [], []>} : vector<8x32xf32>, vector<32x32xf32>, vector<8x32xf32> -> vector<8x32xf32>
    %10 = vector.broadcast %8 : vector<1x32xf32> to vector<8x32xf32>
    %11 = arith.addf %9, %10 : vector<8x32xf32>
    %cst_7 = arith.constant 0.353553385 : f32
    %12 = vector.broadcast %cst_7 : f32 to vector<8x32xf32>
    %13 = arith.mulf %11, %12 : vector<8x32xf32>
    %c0_8 = arith.constant 0 : index
    %c0_9 = arith.constant 0 : index
    %14 = vector.load %arg12[%c0_8, %c0_9] : memref<8x32xf32, #tpu.memory_space<vmem>>, vector<8x32xf32>
    %c0_10 = arith.constant 0 : index
    %c0_11 = arith.constant 0 : index
    %15 = vector.load %arg13[%c0_10, %c0_11] : memref<8x32xf32, #tpu.memory_space<vmem>>, vector<8x32xf32>
    %c0_12 = arith.constant 0 : index
    %c0_13 = arith.constant 0 : index
    %c0_14 = arith.constant 0 : index
    %c0_15 = arith.constant 0 : index
    %16 = vector.load %arg4[%c0_12, %c0_13, %c0_14, %c0_15] : memref<1x1x8x8xf32, #tpu.memory_space<vmem>>, vector<1x1x8x8xf32>
    %17 = vector.shape_cast %16 : vector<1x1x8x8xf32> to vector<8x8xf32>
    %18 = vector.extract_strided_slice %13 {offsets = [0, 0], sizes = [8, 8], strides = [1, 1]} : vector<8x32xf32> to vector<8x8xf32>
    %19 = vector.extract_strided_slice %14 {offsets = [0, 0], sizes = [8, 8], strides = [1, 1]} : vector<8x32xf32> to vector<8x8xf32>
    %20 = vector.extract_strided_slice %15 {offsets = [0, 0], sizes = [8, 8], strides = [1, 1]} : vector<8x32xf32> to vector<8x8xf32>
    %cst_16 = arith.constant dense<0.000000e+00> : vector<8x8xf32>
    %21 = tpu.matmul %18, %19, %cst_16 {dimension_numbers = #tpu.dot_dimension_numbers<[1], [1], [0], [0], [0, 0, 1, 0], [], []>} : vector<8x8xf32>, vector<8x8xf32>, vector<8x8xf32> -> vector<8x8xf32>
    %22 = arith.addf %21, %17 : vector<8x8xf32>
    %cst_17 = arith.constant dense<0xFF800000> : vector<8xf32>
    %23 = vector.multi_reduction <maximumf>, %22, %cst_17 [1] : vector<8x8xf32> to vector<8xf32>
    %24 = vector.shape_cast %23 : vector<8xf32> to vector<8x1xf32>
    %25 = vector.broadcast %24 : vector<8x1xf32> to vector<8x8xf32>
    %26 = arith.subf %22, %25 : vector<8x8xf32>
    %27 = math.exp %26 : vector<8x8xf32>
    %cst_18 = arith.constant dense<0.000000e+00> : vector<8xf32>
    %28 = vector.multi_reduction <add>, %27, %cst_18 [1] : vector<8x8xf32> to vector<8xf32>
    %29 = vector.shape_cast %28 : vector<8xf32> to vector<8x1xf32>
    %30 = tpu.reciprocal %29 {approx = true} : vector<8x1xf32> -> vector<8x1xf32>
    %31 = vector.broadcast %30 : vector<8x1xf32> to vector<8x8xf32>
    %32 = arith.mulf %27, %31 : vector<8x8xf32>
    %cst_19 = arith.constant dense<0.000000e+00> : vector<8x8xf32>
    %33 = tpu.matmul %32, %20, %cst_19 {dimension_numbers = #tpu.dot_dimension_numbers<[1], [0], [0], [1], [0, 0, 1, 1], [], []>} : vector<8x8xf32>, vector<8x8xf32>, vector<8x8xf32> -> vector<8x8xf32>
    %34 = vector.extract_strided_slice %13 {offsets = [0, 8], sizes = [8, 8], strides = [1, 1]} : vector<8x32xf32> to vector<8x8xf32>
    %35 = vector.extract_strided_slice %14 {offsets = [0, 8], sizes = [8, 8], strides = [1, 1]} : vector<8x32xf32> to vector<8x8xf32>
    %36 = vector.extract_strided_slice %15 {offsets = [0, 8], sizes = [8, 8], strides = [1, 1]} : vector<8x32xf32> to vector<8x8xf32>
    %cst_20 = arith.constant dense<0.000000e+00> : vector<8x8xf32>
    %37 = tpu.matmul %34, %35, %cst_20 {dimension_numbers = #tpu.dot_dimension_numbers<[1], [1], [0], [0], [0, 0, 1, 0], [], []>} : vector<8x8xf32>, vector<8x8xf32>, vector<8x8xf32> -> vector<8x8xf32>
    %38 = arith.addf %37, %17 : vector<8x8xf32>
    %cst_21 = arith.constant dense<0xFF800000> : vector<8xf32>
    %39 = vector.multi_reduction <maximumf>, %38, %cst_21 [1] : vector<8x8xf32> to vector<8xf32>
    %40 = vector.shape_cast %39 : vector<8xf32> to vector<8x1xf32>
    %41 = vector.broadcast %40 : vector<8x1xf32> to vector<8x8xf32>
    %42 = arith.subf %38, %41 : vector<8x8xf32>
    %43 = math.exp %42 : vector<8x8xf32>
    %cst_22 = arith.constant dense<0.000000e+00> : vector<8xf32>
    %44 = vector.multi_reduction <add>, %43, %cst_22 [1] : vector<8x8xf32> to vector<8xf32>
    %45 = vector.shape_cast %44 : vector<8xf32> to vector<8x1xf32>
    %46 = tpu.reciprocal %45 {approx = true} : vector<8x1xf32> -> vector<8x1xf32>
    %47 = vector.broadcast %46 : vector<8x1xf32> to vector<8x8xf32>
    %48 = arith.mulf %43, %47 : vector<8x8xf32>
    %cst_23 = arith.constant dense<0.000000e+00> : vector<8x8xf32>
    %49 = tpu.matmul %48, %36, %cst_23 {dimension_numbers = #tpu.dot_dimension_numbers<[1], [0], [0], [1], [0, 0, 1, 1], [], []>} : vector<8x8xf32>, vector<8x8xf32>, vector<8x8xf32> -> vector<8x8xf32>
    %50 = vector.extract_strided_slice %13 {offsets = [0, 16], sizes = [8, 8], strides = [1, 1]} : vector<8x32xf32> to vector<8x8xf32>
    %51 = vector.extract_strided_slice %14 {offsets = [0, 16], sizes = [8, 8], strides = [1, 1]} : vector<8x32xf32> to vector<8x8xf32>
    %52 = vector.extract_strided_slice %15 {offsets = [0, 16], sizes = [8, 8], strides = [1, 1]} : vector<8x32xf32> to vector<8x8xf32>
    %cst_24 = arith.constant dense<0.000000e+00> : vector<8x8xf32>
    %53 = tpu.matmul %50, %51, %cst_24 {dimension_numbers = #tpu.dot_dimension_numbers<[1], [1], [0], [0], [0, 0, 1, 0], [], []>} : vector<8x8xf32>, vector<8x8xf32>, vector<8x8xf32> -> vector<8x8xf32>
    %54 = arith.addf %53, %17 : vector<8x8xf32>
    %cst_25 = arith.constant dense<0xFF800000> : vector<8xf32>
    %55 = vector.multi_reduction <maximumf>, %54, %cst_25 [1] : vector<8x8xf32> to vector<8xf32>
    %56 = vector.shape_cast %55 : vector<8xf32> to vector<8x1xf32>
    %57 = vector.broadcast %56 : vector<8x1xf32> to vector<8x8xf32>
    %58 = arith.subf %54, %57 : vector<8x8xf32>
    %59 = math.exp %58 : vector<8x8xf32>
    %cst_26 = arith.constant dense<0.000000e+00> : vector<8xf32>
    %60 = vector.multi_reduction <add>, %59, %cst_26 [1] : vector<8x8xf32> to vector<8xf32>
    %61 = vector.shape_cast %60 : vector<8xf32> to vector<8x1xf32>
    %62 = tpu.reciprocal %61 {approx = true} : vector<8x1xf32> -> vector<8x1xf32>
    %63 = vector.broadcast %62 : vector<8x1xf32> to vector<8x8xf32>
    %64 = arith.mulf %59, %63 : vector<8x8xf32>
    %cst_27 = arith.constant dense<0.000000e+00> : vector<8x8xf32>
    %65 = tpu.matmul %64, %52, %cst_27 {dimension_numbers = #tpu.dot_dimension_numbers<[1], [0], [0], [1], [0, 0, 1, 1], [], []>} : vector<8x8xf32>, vector<8x8xf32>, vector<8x8xf32> -> vector<8x8xf32>
    %66 = vector.extract_strided_slice %13 {offsets = [0, 24], sizes = [8, 8], strides = [1, 1]} : vector<8x32xf32> to vector<8x8xf32>
    %67 = vector.extract_strided_slice %14 {offsets = [0, 24], sizes = [8, 8], strides = [1, 1]} : vector<8x32xf32> to vector<8x8xf32>
    %68 = vector.extract_strided_slice %15 {offsets = [0, 24], sizes = [8, 8], strides = [1, 1]} : vector<8x32xf32> to vector<8x8xf32>
    %cst_28 = arith.constant dense<0.000000e+00> : vector<8x8xf32>
    %69 = tpu.matmul %66, %67, %cst_28 {dimension_numbers = #tpu.dot_dimension_numbers<[1], [1], [0], [0], [0, 0, 1, 0], [], []>} : vector<8x8xf32>, vector<8x8xf32>, vector<8x8xf32> -> vector<8x8xf32>
    %70 = arith.addf %69, %17 : vector<8x8xf32>
    %cst_29 = arith.constant dense<0xFF800000> : vector<8xf32>
    %71 = vector.multi_reduction <maximumf>, %70, %cst_29 [1] : vector<8x8xf32> to vector<8xf32>
    %72 = vector.shape_cast %71 : vector<8xf32> to vector<8x1xf32>
    %73 = vector.broadcast %72 : vector<8x1xf32> to vector<8x8xf32>
    %74 = arith.subf %70, %73 : vector<8x8xf32>
    %75 = math.exp %74 : vector<8x8xf32>
    %cst_30 = arith.constant dense<0.000000e+00> : vector<8xf32>
    %76 = vector.multi_reduction <add>, %75, %cst_30 [1] : vector<8x8xf32> to vector<8xf32>
    %77 = vector.shape_cast %76 : vector<8xf32> to vector<8x1xf32>
    %78 = tpu.reciprocal %77 {approx = true} : vector<8x1xf32> -> vector<8x1xf32>
    %79 = vector.broadcast %78 : vector<8x1xf32> to vector<8x8xf32>
    %80 = arith.mulf %75, %79 : vector<8x8xf32>
    %cst_31 = arith.constant dense<0.000000e+00> : vector<8x8xf32>
    %81 = tpu.matmul %80, %68, %cst_31 {dimension_numbers = #tpu.dot_dimension_numbers<[1], [0], [0], [1], [0, 0, 1, 1], [], []>} : vector<8x8xf32>, vector<8x8xf32>, vector<8x8xf32> -> vector<8x8xf32>
    %82 = tpu.concatenate %33, %49, %65, %81 in 1 : vector<8x8xf32>, vector<8x8xf32>, vector<8x8xf32>, vector<8x8xf32> -> vector<8x32xf32>
    %c0_32 = arith.constant 0 : index
    %c0_33 = arith.constant 0 : index
    %83 = vector.load %arg7[%c0_32, %c0_33] : memref<32x32xf32, #tpu.memory_space<vmem>>, vector<32x32xf32>
    %cst_34 = arith.constant dense<0.000000e+00> : vector<8x32xf32>
    %84 = tpu.matmul %82, %83, %cst_34 {dimension_numbers = #tpu.dot_dimension_numbers<[1], [0], [0], [1], [0, 0, 1, 1], [], []>} : vector<8x32xf32>, vector<32x32xf32>, vector<8x32xf32> -> vector<8x32xf32>
    %c0_35 = arith.constant 0 : index
    %c0_36 = arith.constant 0 : index
    %85 = vector.load %arg8[%c0_35, %c0_36] : memref<1x32xf32, #tpu.memory_space<vmem>>, vector<1x32xf32>
    %86 = vector.broadcast %85 : vector<1x32xf32> to vector<8x32xf32>
    %87 = arith.addf %84, %86 : vector<8x32xf32>
    %88 = arith.addf %87, %4 : vector<8x32xf32>
    %c0_37 = arith.constant 0 : index
    %c0_38 = arith.constant 0 : index
    %89 = vector.load %arg9[%c0_37, %c0_38] : memref<1x32xf32, #tpu.memory_space<vmem>>, vector<1x32xf32>
    %c0_39 = arith.constant 0 : index
    %c0_40 = arith.constant 0 : index
    %90 = vector.load %arg10[%c0_39, %c0_40] : memref<1x32xf32, #tpu.memory_space<vmem>>, vector<1x32xf32>
    %cst_41 = arith.constant dense<0.000000e+00> : vector<8xf32>
    %91 = vector.multi_reduction <add>, %88, %cst_41 [1] : vector<8x32xf32> to vector<8xf32>
    %92 = vector.shape_cast %91 : vector<8xf32> to vector<8x1xf32>
    %cst_42 = arith.constant 3.200000e+01 : f32
    %93 = vector.broadcast %cst_42 : f32 to vector<8x1xf32>
    %94 = arith.divf %92, %93 : vector<8x1xf32>
    %95 = vector.broadcast %94 : vector<8x1xf32> to vector<8x32xf32>
    %96 = arith.subf %88, %95 : vector<8x32xf32>
    %97 = arith.mulf %96, %96 : vector<8x32xf32>
    %cst_43 = arith.constant dense<0.000000e+00> : vector<8xf32>
    %98 = vector.multi_reduction <add>, %97, %cst_43 [1] : vector<8x32xf32> to vector<8xf32>
    %99 = vector.shape_cast %98 : vector<8xf32> to vector<8x1xf32>
    %cst_44 = arith.constant 0.0322580636 : f32
    %100 = vector.broadcast %cst_44 : f32 to vector<8x1xf32>
    %101 = arith.mulf %99, %100 : vector<8x1xf32>
    %102 = math.sqrt %101 : vector<8x1xf32>
    %103 = vector.broadcast %89 : vector<1x32xf32> to vector<8x32xf32>
    %104 = arith.mulf %103, %96 : vector<8x32xf32>
    %cst_45 = arith.constant 9.99999997E-7 : f32
    %105 = vector.broadcast %cst_45 : f32 to vector<8x1xf32>
    %106 = arith.addf %102, %105 : vector<8x1xf32>
    %107 = vector.broadcast %106 : vector<8x1xf32> to vector<8x32xf32>
    %108 = arith.divf %104, %107 : vector<8x32xf32>
    %109 = vector.broadcast %90 : vector<1x32xf32> to vector<8x32xf32>
    %110 = arith.addf %108, %109 : vector<8x32xf32>
    %c0_46 = arith.constant 0 : index
    %c0_47 = arith.constant 0 : index
    %c0_48 = arith.constant 0 : index
    %111 = vector.load %arg11[%c0_46, %c0_47, %c0_48] : memref<1x8x32xf32, #tpu.memory_space<vmem>>, vector<1x8x32xf32>
    %112 = vector.shape_cast %111 : vector<1x8x32xf32> to vector<8x32xf32>
    %113 = vector.shape_cast %110 : vector<8x32xf32> to vector<1x8x32xf32>
    tpu.vector_store %arg11[%c0_46, %c0_47, %c0_48], %113 {strides = array<i32>} : memref<1x8x32xf32, #tpu.memory_space<vmem>>, vector<1x8x32xf32>,
    return
  }
  func.func @transform_0(%arg0: i32, %arg1: i32) -> (i32, i32, i32) {
    %c0_i32 = arith.constant 0 : i32
    %c0_i32_0 = arith.constant 0 : i32
    return %arg0, %arg1, %c0_i32 : i32, i32, i32
  }
  func.func @transform_1(%arg0: i32, %arg1: i32) -> (i32, i32, i32) {
    %c0_i32 = arith.constant 0 : i32
    %c0_i32_0 = arith.constant 0 : i32
    %c0_i32_1 = arith.constant 0 : i32
    return %arg0, %c0_i32, %c0_i32_0 : i32, i32, i32
  }
  func.func @transform_2(%arg0: i32, %arg1: i32) -> (i32, i32, i32, i32) {
    %c0_i32 = arith.constant 0 : i32
    %c0_i32_0 = arith.constant 0 : i32
    %c0_i32_1 = arith.constant 0 : i32
    return %arg0, %c0_i32, %arg1, %c0_i32_0 : i32, i32, i32, i32
  }
  func.func @transform_3(%arg0: i32, %arg1: i32) -> (i32, i32) {
    %c0_i32 = arith.constant 0 : i32
    %c0_i32_0 = arith.constant 0 : i32
    %c0_i32_1 = arith.constant 0 : i32
    return %c0_i32, %c0_i32_0 : i32, i32
  }
  func.func @transform_4(%arg0: i32, %arg1: i32) -> (i32, i32) {
    %c0_i32 = arith.constant 0 : i32
    %c0_i32_0 = arith.constant 0 : i32
    %c0_i32_1 = arith.constant 0 : i32
    return %c0_i32, %c0_i32_0 : i32, i32
  }
  func.func @transform_5(%arg0: i32, %arg1: i32) -> (i32, i32) {
    %c0_i32 = arith.constant 0 : i32
    %c0_i32_0 = arith.constant 0 : i32
    %c0_i32_1 = arith.constant 0 : i32
    return %c0_i32, %c0_i32_0 : i32, i32
  }
  func.func @transform_6(%arg0: i32, %arg1: i32) -> (i32, i32) {
    %c0_i32 = arith.constant 0 : i32
    %c0_i32_0 = arith.constant 0 : i32
    %c0_i32_1 = arith.constant 0 : i32
    return %c0_i32, %c0_i32_0 : i32, i32
  }
  func.func @transform_7(%arg0: i32, %arg1: i32) -> (i32, i32) {
    %c0_i32 = arith.constant 0 : i32
    %c0_i32_0 = arith.constant 0 : i32
    %c0_i32_1 = arith.constant 0 : i32
    return %c0_i32, %c0_i32_0 : i32, i32
  }
  func.func @transform_8(%arg0: i32, %arg1: i32) -> (i32, i32) {
    %c0_i32 = arith.constant 0 : i32
    %c0_i32_0 = arith.constant 0 : i32
    %c0_i32_1 = arith.constant 0 : i32
    return %c0_i32, %c0_i32_0 : i32, i32
  }
  func.func @transform_9(%arg0: i32, %arg1: i32) -> (i32, i32, i32) {
    %c0_i32 = arith.constant 0 : i32
    %c0_i32_0 = arith.constant 0 : i32
    return %arg0, %arg1, %c0_i32 : i32, i32, i32
  }
}

</mosaic_0001>

<llo_original>
// kernel: tpu_custom_call.1
$region0: #{tpu_custom_call.1}
  #allocation0 [shape = 'u32[]', space=smem, size = 0x4, offset = 0x4, fixed_abs, tag = 'smem constant byte address 0x4 - core index']
  #allocation1 [shape = 'u32[72,128]{1,0:T(1,128)}', space=vmem, size = 0x9000, scoped, tag = 'internal scratch']
  #allocation2 [shape = 'f32[8,32]{1,0:T(8,128)}', space=vmem, size = 0x1000, scoped, tag = 'scratch operand']
  #allocation3 [shape = 'f32[8,32]{1,0:T(8,128)}', space=vmem, size = 0x1000, scoped, tag = 'scratch operand']
  %s0 = inlined_call_operand.hbm [shape: f32[2,8,32], index: 0, kind: input, shape index: {}]
  %s1 = inlined_call_operand.hbm [shape: f32[2,8,32], index: 1, kind: input, shape index: {}]
  %s2 = inlined_call_operand.hbm [shape: f32[2,1,8,8], index: 2, kind: input, shape index: {}]
  %s3 = inlined_call_operand.hbm [shape: f32[32,96], index: 3, kind: input, shape index: {}]
  %s4 = inlined_call_operand.vmem [shape: f32[1,96], index: 4, kind: input, shape index: {}]
  %s5 = inlined_call_operand.hbm [shape: f32[32,32], index: 5, kind: input, shape index: {}]
  %s6 = inlined_call_operand.vmem [shape: f32[1,32], index: 6, kind: input, shape index: {}]
  %s7 = inlined_call_operand.vmem [shape: f32[1,32], index: 7, kind: input, shape index: {}]
  %s8 = inlined_call_operand.vmem [shape: f32[1,32], index: 8, kind: input, shape index: {}]
  %s9 = inlined_call_operand.hbm [shape: f32[2,8,32], index: 9, kind: output, shape index: {}]
  %s10 = sld [smem:[#allocation0]]
  $region93: #{tpu_custom_call.1} parent=0
    _
  %s12 = ssub.s32 1, %s10
  %s13 = scalar_select 0, %s12, %s10
  $region1: #{tpu_custom_call.1} parent=0
    #allocation4 [shape = 'u8[8192]{0}', space=vmem, size = 0x2000, scoped, tag = 'input window, operand 0']
    #allocation5 [shape = 's32[2]{0}', space=sflag, size = 0x8, scoped, tag = 'scoped memory for tpu_custom_call.1']
    #allocation6 [shape = 's32[2]{0}', space=sflag, size = 0x8, scoped, tag = 'scoped memory for tpu_custom_call.1']
    #allocation7 [shape = 'u8[8192]{0}', space=vmem, size = 0x2000, scoped, tag = 'input window, operand 1']
    #allocation8 [shape = 's32[2]{0}', space=sflag, size = 0x8, scoped, tag = 'scoped memory for tpu_custom_call.1']
    #allocation9 [shape = 'u8[8192]{0}', space=vmem, size = 0x2000, scoped, tag = 'input window, operand 2']
    #allocation10 [shape = 'u8[16384]{0}', space=vmem, size = 0x4000, scoped, tag = 'input window, operand 3, single buffered']
    #allocation11 [shape = 's32[1]{0}', space=sflag, size = 0x4, scoped, tag = 'scoped memory for tpu_custom_call.1']
    #allocation12 [shape = 'u8[16384]{0}', space=vmem, size = 0x4000, scoped, tag = 'input window, operand 5, single buffered']
    #allocation13 [shape = 'u8[8192]{0}', space=vmem, size = 0x2000, scoped, tag = 'output window, operand 0']
    %14 = vsyncpa [#allocation5], 0
    %s15 = scalar_lea.sflag [#allocation5], 1
    %16 = vsyncpa %s15, 0
    %17 = vsyncpa [#allocation8], 0
    %s18 = scalar_lea.sflag [#allocation8], 1
    %19 = vsyncpa %s18, 0
    %20 = vsyncpa [#allocation11], 0
    %21 = vsyncpa [#allocation6], 0
    %s22 = scalar_lea.sflag [#allocation6], 1
    %23 = vsyncpa %s22, 0
    loop: start=0, step=1, limit=4
    $region2: #{tpu_custom_call.1} parent=1 // loop_pre_header
      _
    $region3: #{tpu_custom_call.1} parent=1 // loop_header
      %s25 = sphi 0, %s29
      %p26 = scmp.ge.s32.totalorder %s25, 4
      %s32 = sphi 0, %s44
      %s33 = sphi 0, %s40
      %s34 = sphi 0, %s32
      %s35 = sphi 0, %s33
      %s36 = sphi 0, %s34
      %s37 = sphi 0, %s35
      %s49 = sphi 0, %s51
      %s52 = sphi 0, %s49
      %s53 = sphi 0, %s52
      %s69 = sphi 0, %s53
      %s75 = sphi 0, %s77
      %s78 = sphi 0, %s75
      %s79 = sphi 0, %s78
      %s95 = sphi 0, %s79
      %s103 = sphi 0, %s105
      %s106 = sphi 0, %s103
      %s107 = sphi 0, %s106
      %s123 = sphi 0, %s107
      %s127 = sphi 0, %s127
      %s129 = sphi 0, %s127
      %s130 = sphi 0, %s129
      %s144 = sphi 0, %s130
      %s148 = sphi 0, %s148
      %s150 = sphi 0, %s148
      %s151 = sphi 0, %s150
      %s165 = sphi 0, %s151
      %s169 = sphi 0, %s169
      %s171 = sphi 0, %s169
      %s172 = sphi 0, %s171
      %s186 = sphi 0, %s172
      %s190 = sphi 0, %s190
      %s192 = sphi 0, %s190
      %s193 = sphi 0, %s192
      %s207 = sphi 0, %s193
      %s211 = sphi 0, %s211
      %s213 = sphi 0, %s211
      %s214 = sphi 0, %s213
      %s228 = sphi 0, %s214
      %s232 = sphi 0, %s232
      %s234 = sphi 0, %s232
      %s235 = sphi 0, %s234
      %s249 = sphi 0, %s235
      %s257 = sphi 0, %s259
      %s260 = sphi 0, %s257
      %s261 = sphi 0, %s260
      %s277 = sphi 0, %s261
    $region4: #{tpu_custom_call.1} parent=1 // loop_header_branch
      %28 = sbr.rel (%p26) target = $region8
    $region5: #{tpu_custom_call.1} parent=1 // loop_body
      %s30 = ssub.s32 %s25, 1
      %s31 = ssub.s32 %s25, 2
      %s38 = sadd.s32 1, %s33
      %p39 = scmp.ge.s32.totalorder %s38, 1
      %s40 = scalar_select %p39, 0, %s38
      %s41 = sadd.s32 1, %s32
      %s42 = scalar_select %p39, %s41, %s32
      %p43 = scmp.ge.s32.totalorder %s42, 2
      %s44 = scalar_select %p43, 0, %s42
      %s45 = ssub.s32 %s32, %s44
      %s46 = ssub.s32 %s33, %s40
      %s47 = sor.u32 %s45, %s46
      %p48 = scmp.eq.s32.totalorder %s47, 0
      %s50 = sadd.s32 %s49, 1
      %s51 = scalar_select %p48, %s49, %s50
      %p54 = pneg %p48
      %p55 = scmp.eq.s32.totalorder %s25, 1
      %p56 = por %p54, %p55
      %p57 = scmp.ne.s32.totalorder %s49, %s52
      %p58 = scmp.eq.s32.totalorder %s25, 0
      %p59 = por %p57, %p58
      %p60 = scmp.ne.s32.totalorder %s49, %s52
      %p61 = scmp.eq.s32.totalorder %s30, 1
      %p62 = por %p60, %p61
      %p63 = scmp.ne.s32.totalorder %s52, %s53
      %p64 = scmp.eq.s32.totalorder %s30, 0
      %p65 = por %p63, %p64
      %p66 = scmp.ne.s32.totalorder %s52, %s53
      %p67 = scmp.eq.s32.totalorder %s31, 1
      %p68 = por %p66, %p67
      %p70 = scmp.ne.s32.totalorder %s53, %s69
      %p71 = scmp.eq.s32.totalorder %s31, 0
      %p72 = por %p70, %p71
      %s73 = ssub.s32 %s32, %s44
      %p74 = scmp.eq.s32.totalorder %s73, 0
      %s76 = sadd.s32 %s75, 1
      %s77 = scalar_select %p74, %s75, %s76
      %p80 = pneg %p74
      %p81 = scmp.eq.s32.totalorder %s25, 1
      %p82 = por %p80, %p81
      %p83 = scmp.ne.s32.totalorder %s75, %s78
      %p84 = scmp.eq.s32.totalorder %s25, 0
      %p85 = por %p83, %p84
      %p86 = scmp.ne.s32.totalorder %s75, %s78
      %p87 = scmp.eq.s32.totalorder %s30, 1
      %p88 = por %p86, %p87
      %p89 = scmp.ne.s32.totalorder %s78, %s79
      %p90 = scmp.eq.s32.totalorder %s30, 0
      %p91 = por %p89, %p90
      %p92 = scmp.ne.s32.totalorder %s78, %s79
      %p93 = scmp.eq.s32.totalorder %s31, 1
      %p94 = por %p92, %p93
      %p96 = scmp.ne.s32.totalorder %s79, %s95
      %p97 = scmp.eq.s32.totalorder %s31, 0
      %p98 = por %p96, %p97
      %s99 = ssub.s32 %s32, %s44
      %s100 = ssub.s32 %s33, %s40
      %s101 = sor.u32 %s99, %s100
      %p102 = scmp.eq.s32.totalorder %s101, 0
      %s104 = sadd.s32 %s103, 1
      %s105 = scalar_select %p102, %s103, %s104
      %p108 = pneg %p102
      %p109 = scmp.eq.s32.totalorder %s25, 1
      %p110 = por %p108, %p109
      %p111 = scmp.ne.s32.totalorder %s103, %s106
      %p112 = scmp.eq.s32.totalorder %s25, 0
      %p113 = por %p111, %p112
      %p114 = scmp.ne.s32.totalorder %s103, %s106
      %p115 = scmp.eq.s32.totalorder %s30, 1
      %p116 = por %p114, %p115
      %p117 = scmp.ne.s32.totalorder %s106, %s107
      %p118 = scmp.eq.s32.totalorder %s30, 0
      %p119 = por %p117, %p118
      %p120 = scmp.ne.s32.totalorder %s106, %s107
      %p121 = scmp.eq.s32.totalorder %s31, 1
      %p122 = por %p120, %p121
      %p124 = scmp.ne.s32.totalorder %s107, %s123
      %p125 = scmp.eq.s32.totalorder %s31, 0
      %p126 = por %p124, %p125
      %s128 = sadd.s32 %s127, 1
      %p131 = scmp.eq.s32.totalorder %s25, 1
      %p132 = scmp.ne.s32.totalorder %s127, %s129
      %p133 = scmp.eq.s32.totalorder %s25, 0
      %p134 = por %p132, %p133
      %p135 = scmp.ne.s32.totalorder %s127, %s129
      %p136 = scmp.eq.s32.totalorder %s30, 1
      %p137 = por %p135, %p136
      %p138 = scmp.ne.s32.totalorder %s129, %s130
      %p139 = scmp.eq.s32.totalorder %s30, 0
      %p140 = por %p138, %p139
      %p141 = scmp.ne.s32.totalorder %s129, %s130
      %p142 = scmp.eq.s32.totalorder %s31, 1
      %p143 = por %p141, %p142
      %p145 = scmp.ne.s32.totalorder %s130, %s144
      %p146 = scmp.eq.s32.totalorder %s31, 0
      %p147 = por %p145, %p146
      %s149 = sadd.s32 %s148, 1
      %p152 = scmp.eq.s32.totalorder %s25, 1
      %p153 = scmp.ne.s32.totalorder %s148, %s150
      %p154 = scmp.eq.s32.totalorder %s25, 0
      %p155 = por %p153, %p154
      %p156 = scmp.ne.s32.totalorder %s148, %s150
      %p157 = scmp.eq.s32.totalorder %s30, 1
      %p158 = por %p156, %p157
      %p159 = scmp.ne.s32.totalorder %s150, %s151
      %p160 = scmp.eq.s32.totalorder %s30, 0
      %p161 = por %p159, %p160
      %p162 = scmp.ne.s32.totalorder %s150, %s151
      %p163 = scmp.eq.s32.totalorder %s31, 1
      %p164 = por %p162, %p163
      %p166 = scmp.ne.s32.totalorder %s151, %s165
      %p167 = scmp.eq.s32.totalorder %s31, 0
      %p168 = por %p166, %p167
      %s170 = sadd.s32 %s169, 1
      %p173 = scmp.eq.s32.totalorder %s25, 1
      %p174 = scmp.ne.s32.totalorder %s169, %s171
      %p175 = scmp.eq.s32.totalorder %s25, 0
      %p176 = por %p174, %p175
      %p177 = scmp.ne.s32.totalorder %s169, %s171
      %p178 = scmp.eq.s32.totalorder %s30, 1
      %p179 = por %p177, %p178
      %p180 = scmp.ne.s32.totalorder %s171, %s172
      %p181 = scmp.eq.s32.totalorder %s30, 0
      %p182 = por %p180, %p181
      %p183 = scmp.ne.s32.totalorder %s171, %s172
      %p184 = scmp.eq.s32.totalorder %s31, 1
      %p185 = por %p183, %p184
      %p187 = scmp.ne.s32.totalorder %s172, %s186
      %p188 = scmp.eq.s32.totalorder %s31, 0
      %p189 = por %p187, %p188
      %s191 = sadd.s32 %s190, 1
      %p194 = scmp.eq.s32.totalorder %s25, 1
      %p195 = scmp.ne.s32.totalorder %s190, %s192
      %p196 = scmp.eq.s32.totalorder %s25, 0
      %p197 = por %p195, %p196
      %p198 = scmp.ne.s32.totalorder %s190, %s192
      %p199 = scmp.eq.s32.totalorder %s30, 1
      %p200 = por %p198, %p199
      %p201 = scmp.ne.s32.totalorder %s192, %s193
      %p202 = scmp.eq.s32.totalorder %s30, 0
      %p203 = por %p201, %p202
      %p204 = scmp.ne.s32.totalorder %s192, %s193
      %p205 = scmp.eq.s32.totalorder %s31, 1
      %p206 = por %p204, %p205
      %p208 = scmp.ne.s32.totalorder %s193, %s207
      %p209 = scmp.eq.s32.totalorder %s31, 0
      %p210 = por %p208, %p209
      %s212 = sadd.s32 %s211, 1
      %p215 = scmp.eq.s32.totalorder %s25, 1
      %p216 = scmp.ne.s32.totalorder %s211, %s213
      %p217 = scmp.eq.s32.totalorder %s25, 0
      %p218 = por %p216, %p217
      %p219 = scmp.ne.s32.totalorder %s211, %s213
      %p220 = scmp.eq.s32.totalorder %s30, 1
      %p221 = por %p219, %p220
      %p222 = scmp.ne.s32.totalorder %s213, %s214
      %p223 = scmp.eq.s32.totalorder %s30, 0
      %p224 = por %p222, %p223
      %p225 = scmp.ne.s32.totalorder %s213, %s214
      %p226 = scmp.eq.s32.totalorder %s31, 1
      %p227 = por %p225, %p226
      %p229 = scmp.ne.s32.totalorder %s214, %s228
      %p230 = scmp.eq.s32.totalorder %s31, 0
      %p231 = por %p229, %p230
      %s233 = sadd.s32 %s232, 1
      %p236 = scmp.eq.s32.totalorder %s25, 1
      %p237 = scmp.ne.s32.totalorder %s232, %s234
      %p238 = scmp.eq.s32.totalorder %s25, 0
      %p239 = por %p237, %p238
      %p240 = scmp.ne.s32.totalorder %s232, %s234
      %p241 = scmp.eq.s32.totalorder %s30, 1
      %p242 = por %p240, %p241
      %p243 = scmp.ne.s32.totalorder %s234, %s235
      %p244 = scmp.eq.s32.totalorder %s30, 0
      %p245 = por %p243, %p244
      %p246 = scmp.ne.s32.totalorder %s234, %s235
      %p247 = scmp.eq.s32.totalorder %s31, 1
      %p248 = por %p246, %p247
      %p250 = scmp.ne.s32.totalorder %s235, %s249
      %p251 = scmp.eq.s32.totalorder %s31, 0
      %p252 = por %p250, %p251
      %s253 = ssub.s32 %s32, %s44
      %s254 = ssub.s32 %s33, %s40
      %s255 = sor.u32 %s253, %s254
      %p256 = scmp.eq.s32.totalorder %s255, 0
      %s258 = sadd.s32 %s257, 1
      %s259 = scalar_select %p256, %s257, %s258
      %p262 = pneg %p256
      %p263 = scmp.eq.s32.totalorder %s25, 1
      %p264 = por %p262, %p263
      %p265 = scmp.ne.s32.totalorder %s257, %s260
      %p266 = scmp.eq.s32.totalorder %s25, 0
      %p267 = por %p265, %p266
      %p268 = scmp.ne.s32.totalorder %s257, %s260
      %p269 = scmp.eq.s32.totalorder %s30, 1
      %p270 = por %p268, %p269
      %p271 = scmp.ne.s32.totalorder %s260, %s261
      %p272 = scmp.eq.s32.totalorder %s30, 0
      %p273 = por %p271, %p272
      %p274 = scmp.ne.s32.totalorder %s260, %s261
      %p275 = scmp.eq.s32.totalorder %s31, 1
      %p276 = por %p274, %p275
      %p278 = scmp.ne.s32.totalorder %s261, %s277
      %p279 = scmp.eq.s32.totalorder %s31, 0
      %p280 = por %p278, %p279
      %p281 = scmp.le.s32.totalorder 1, %s25
      %p282 = scmp.lt.s32.totalorder %s25, 3
      %p283 = pnand %p281, %p282
      %p284 = pneg %p283
      // Predicated region
      $region9: #{tpu_custom_call.1} parent=5 // pred_check
        _
      $region10: #{tpu_custom_call.1} parent=5 // pred_check_branch
        %286 = sbr.rel (%p283) target = $region12
      $region11: #{tpu_custom_call.1} parent=5 // pred_region
        %s287 = ssub.s32 %s25, 1
        // Predicated region
        $region13: #{tpu_custom_call.1} parent=11 // pred_check
          %p288 = pneg %p140
        $region14: #{tpu_custom_call.1} parent=11 // pred_check_branch
          %290 = sbr.rel (%p288) target = $region16
        $region15: #{tpu_custom_call.1} parent=11 // pred_region
          %292 = vsyncadd [#allocation11], 0
          %s293 = sshll.u32 %s3, 4
          %s294 = int_to_ptr.hbm [resolvable:$true] %s293
          %s295 = sshll.u32 [#allocation10], 4
          %s296 = int_to_ptr.vmem [resolvable:$true] %s295
          %301 = dma.hbm_to_vmem [thread:$0]  %s294, 512, %s296, [#allocation11], 128, 128, 8
        $region16: #{tpu_custom_call.1} parent=11 // pred_fallthru
          _
        // Predicated region
        $region17: #{tpu_custom_call.1} parent=11 // pred_check
          %p302 = pneg %p161
        $region18: #{tpu_custom_call.1} parent=11 // pred_check_branch
          %304 = sbr.rel (%p302) target = $region20
        $region19: #{tpu_custom_call.1} parent=11 // pred_region
          _
        $region20: #{tpu_custom_call.1} parent=11 // pred_fallthru
          _
        // Predicated region
        $region21: #{tpu_custom_call.1} parent=11 // pred_check
          %p305 = pneg %p182
        $region22: #{tpu_custom_call.1} parent=11 // pred_check_branch
          %307 = sbr.rel (%p305) target = $region24
        $region23: #{tpu_custom_call.1} parent=11 // pred_region
          %309 = vsyncadd [#allocation11], 0
          %s310 = sshll.u32 %s5, 4
          %s311 = int_to_ptr.hbm [resolvable:$true] %s310
          %s312 = sshll.u32 [#allocation12], 4
          %s313 = int_to_ptr.vmem [resolvable:$true] %s312
          %318 = dma.hbm_to_vmem [thread:$0]  %s311, 512, %s313, [#allocation11], 128, 128, 8
        $region24: #{tpu_custom_call.1} parent=11 // pred_fallthru
          _
        // Predicated region
        $region25: #{tpu_custom_call.1} parent=11 // pred_check
          %p319 = pneg %p203
        $region26: #{tpu_custom_call.1} parent=11 // pred_check_branch
          %321 = sbr.rel (%p319) target = $region28
        $region27: #{tpu_custom_call.1} parent=11 // pred_region
          _
        $region28: #{tpu_custom_call.1} parent=11 // pred_fallthru
          _
        // Predicated region
        $region29: #{tpu_custom_call.1} parent=11 // pred_check
          %p322 = pneg %p224
        $region30: #{tpu_custom_call.1} parent=11 // pred_check_branch
          %324 = sbr.rel (%p322) target = $region32
        $region31: #{tpu_custom_call.1} parent=11 // pred_region
          _
        $region32: #{tpu_custom_call.1} parent=11 // pred_fallthru
          _
        // Predicated region
        $region33: #{tpu_custom_call.1} parent=11 // pred_check
          %p325 = pneg %p245
        $region34: #{tpu_custom_call.1} parent=11 // pred_check_branch
          %327 = sbr.rel (%p325) target = $region36
        $region35: #{tpu_custom_call.1} parent=11 // pred_region
          _
        $region36: #{tpu_custom_call.1} parent=11 // pred_fallthru
          _
      $region12: #{tpu_custom_call.1} parent=5 // pred_fallthru
        _
      %p328 = scmp.lt.s32.totalorder %s25, 2
      // Predicated region
      $region37: #{tpu_custom_call.1} parent=5 // pred_check
        %p329 = pneg %p328
      $region38: #{tpu_custom_call.1} parent=5 // pred_check_branch
        %331 = sbr.rel (%p329) target = $region40
      $region39: #{tpu_custom_call.1} parent=5 // pred_region
        // Predicated region
        $region41: #{tpu_custom_call.1} parent=39 // pred_check
          %p332 = pneg %p59
        $region42: #{tpu_custom_call.1} parent=39 // pred_check_branch
          %334 = sbr.rel (%p332) target = $region44
        $region43: #{tpu_custom_call.1} parent=39 // pred_region
          %s335 = sand.u32 %s49, 1
          %s336 = scalar_lea.sflag [#allocation5], %s335
          %s337 = sand.u32 %s49, 1
          %s338 = smul.addr %s337, 8
          %s339 = scalar_lea.vmem [#allocation4], %s338
          %341 = vsyncadd %s336, 0
          %s342 = sadd.s32 %s33, %s32
          %s343 = smul.addr %s342, 8
          %s344 = scalar_lea.hbm %s0, %s343
          %s346 = sshll.u32 %s344, 4
          %s347 = int_to_ptr.hbm [resolvable:$true] %s346
          %s348 = sshll.u32 %s339, 4
          %s349 = int_to_ptr.vmem [resolvable:$true] %s348
          %351 = dma.hbm_to_vmem [thread:$0]  %s347, 128, %s349, %s336
        $region44: #{tpu_custom_call.1} parent=39 // pred_fallthru
          _
        // Predicated region
        $region45: #{tpu_custom_call.1} parent=39 // pred_check
          %p352 = pneg %p85
        $region46: #{tpu_custom_call.1} parent=39 // pred_check_branch
          %354 = sbr.rel (%p352) target = $region48
        $region47: #{tpu_custom_call.1} parent=39 // pred_region
          %s355 = sand.u32 %s25, 1
          %s356 = scalar_lea.sflag [#allocation8], %s355
          %s357 = sand.u32 %s75, 1
          %s358 = smul.addr %s357, 8
          %s359 = scalar_lea.vmem [#allocation7], %s358
          %361 = vsyncadd %s356, 0
          %s362 = smul.addr %s32, 8
          %s363 = scalar_lea.hbm %s1, %s362
          %s365 = sshll.u32 %s363, 4
          %s366 = int_to_ptr.hbm [resolvable:$true] %s365
          %s367 = sshll.u32 %s359, 4
          %s368 = int_to_ptr.vmem [resolvable:$true] %s367
          %370 = dma.hbm_to_vmem [thread:$0]  %s366, 128, %s368, %s356
        $region48: #{tpu_custom_call.1} parent=39 // pred_fallthru
          _
        // Predicated region
        $region49: #{tpu_custom_call.1} parent=39 // pred_check
          %p371 = pneg %p113
        $region50: #{tpu_custom_call.1} parent=39 // pred_check_branch
          %373 = sbr.rel (%p371) target = $region52
        $region51: #{tpu_custom_call.1} parent=39 // pred_region
          %s374 = sand.u32 %s25, 1
          %s375 = scalar_lea.sflag [#allocation8], %s374
          %s376 = sand.u32 %s103, 1
          %s377 = smul.addr %s376, 8
          %s378 = scalar_lea.vmem [#allocation9], %s377
          %380 = vsyncadd %s375, 0
          %s381 = sadd.s32 %s33, %s32
          %s382 = smul.addr %s381, 8
          %s383 = scalar_lea.hbm %s2, %s382
          %s385 = sshll.u32 %s383, 4
          %s386 = int_to_ptr.hbm [resolvable:$true] %s385
          %s387 = sshll.u32 %s378, 4
          %s388 = int_to_ptr.vmem [resolvable:$true] %s387
          %390 = dma.hbm_to_vmem [thread:$0]  %s386, 128, %s388, %s375
        $region52: #{tpu_custom_call.1} parent=39 // pred_fallthru
          _
      $region40: #{tpu_custom_call.1} parent=5 // pred_fallthru
        _
      %p391 = scmp.le.s32.totalorder 1, %s25
      %p392 = scmp.lt.s32.totalorder %s25, 3
      %p393 = pnand %p391, %p392
      %p394 = pneg %p393
      // Predicated region
      $region53: #{tpu_custom_call.1} parent=5 // pred_check
        _
      $region54: #{tpu_custom_call.1} parent=5 // pred_check_branch
        %396 = sbr.rel (%p393) target = $region56
      $region55: #{tpu_custom_call.1} parent=5 // pred_region
        %s397 = ssub.s32 %s25, 1
        %s398 = sand.u32 %s52, 1
        %s399 = scalar_lea.sflag [#allocation5], %s398
        %s400 = sand.u32 %s52, 1
        %s401 = smul.addr %s400, 8
        %s402 = scalar_lea.vmem [#allocation4], %s401
        // Predicated region
        $region57: #{tpu_custom_call.1} parent=55 // pred_check
          %p403 = pneg %p65
        $region58: #{tpu_custom_call.1} parent=55 // pred_check_branch
          %405 = sbr.rel (%p403) target = $region60
        $region59: #{tpu_custom_call.1} parent=55 // pred_region
          %407 = dma.done %s399, 128
        $region60: #{tpu_custom_call.1} parent=55 // pred_fallthru
          _
        %s408 = sand.u32 %s30, 1
        %s409 = scalar_lea.sflag [#allocation8], %s408
        %s410 = sand.u32 %s78, 1
        %s411 = smul.addr %s410, 8
        %s412 = scalar_lea.vmem [#allocation7], %s411
        // Predicated region
        $region61: #{tpu_custom_call.1} parent=55 // pred_check
          %p413 = pneg %p91
        $region62: #{tpu_custom_call.1} parent=55 // pred_check_branch
          %415 = sbr.rel (%p413) target = $region64
        $region63: #{tpu_custom_call.1} parent=55 // pred_region
          %417 = dma.done %s409, 128
        $region64: #{tpu_custom_call.1} parent=55 // pred_fallthru
          _
        %s418 = sand.u32 %s30, 1
        %s419 = scalar_lea.sflag [#allocation8], %s418
        %s420 = sand.u32 %s106, 1
        %s421 = smul.addr %s420, 8
        %s422 = scalar_lea.vmem [#allocation9], %s421
        // Predicated region
        $region65: #{tpu_custom_call.1} parent=55 // pred_check
          %p423 = pneg %p119
        $region66: #{tpu_custom_call.1} parent=55 // pred_check_branch
          %425 = sbr.rel (%p423) target = $region68
        $region67: #{tpu_custom_call.1} parent=55 // pred_region
          %427 = dma.done %s419, 128
        $region68: #{tpu_custom_call.1} parent=55 // pred_fallthru
          _
        // Predicated region
        $region69: #{tpu_custom_call.1} parent=55 // pred_check
          %p428 = pneg %p140
        $region70: #{tpu_custom_call.1} parent=55 // pred_check_branch
          %430 = sbr.rel (%p428) target = $region72
        $region71: #{tpu_custom_call.1} parent=55 // pred_region
          %432 = dma.done [#allocation11], 512
        $region72: #{tpu_custom_call.1} parent=55 // pred_fallthru
          _
        // Predicated region
        $region73: #{tpu_custom_call.1} parent=55 // pred_check
          %p433 = pneg %p182
        $region74: #{tpu_custom_call.1} parent=55 // pred_check_branch
          %435 = sbr.rel (%p433) target = $region76
        $region75: #{tpu_custom_call.1} parent=55 // pred_region
          %437 = dma.done [#allocation11], 512
        $region76: #{tpu_custom_call.1} parent=55 // pred_fallthru
          _
        %s438 = sand.u32 %s52, 1
        %s439 = scalar_lea.sflag [#allocation5], %s438
        %s440 = sand.u32 %s52, 1
        %s441 = smul.addr %s440, 8
        %s442 = scalar_lea.vmem [#allocation4], %s441
        %p443 = pneg %p65
        %p444 = pneg %p62
        %s445 = sand.u32 %s30, 1
        %s446 = scalar_lea.sflag [#allocation8], %s445
        %s447 = sand.u32 %s78, 1
        %s448 = smul.addr %s447, 8
        %s449 = scalar_lea.vmem [#allocation7], %s448
        %p450 = pneg %p91
        %p451 = pneg %p88
        %s452 = sand.u32 %s30, 1
        %s453 = scalar_lea.sflag [#allocation8], %s452
        %s454 = sand.u32 %s106, 1
        %s455 = smul.addr %s454, 8
        %s456 = scalar_lea.vmem [#allocation9], %s455
        %p457 = pneg %p119
        %p458 = pneg %p116
        %p459 = pneg %p140
        %p460 = pneg %p137
        %p461 = pneg %p161
        %p462 = pneg %p158
        %p463 = pneg %p182
        %p464 = pneg %p179
        %p465 = pneg %p203
        %p466 = pneg %p200
        %p467 = pneg %p224
        %p468 = pneg %p221
        %p469 = pneg %p245
        %p470 = pneg %p242
        %p471 = pneg %p273
        %p472 = pneg %p270
        %s473 = sand.u32 %s260, 1
        %s474 = scalar_lea.sflag [#allocation6], %s473
        %s475 = sand.u32 %s260, 1
        %s476 = smul.addr %s475, 8
        %s477 = scalar_lea.vmem [#allocation13], %s476
        %p478 = scmp.eq.s32.totalorder %s35, 0
        // Predicated region
        $region77: #{tpu_custom_call.1} parent=55 // pred_check
          %p479 = pneg %p478
        $region78: #{tpu_custom_call.1} parent=55 // pred_check_branch
          %481 = sbr.rel (%p479) target = $region80
        $region79: #{tpu_custom_call.1} parent=55 // pred_region
          %v482 = vld [vmem:[#allocation10] sm:$0xff]
          %v483 = vld [vmem:[#allocation10 + $0x8] sm:$0xff]
          %v484 = vld [vmem:[#allocation10 + $0x10] sm:$0xff]
          %v485 = vld [vmem:[#allocation10 + $0x18] sm:$0xff]
          %v486 = vld [vmem:[%s4] sm:$0x1]
          %v487 = vld [vmem:[%s412] sm:$0xff]
          %v489 = vperm.slane %v486, 0
          %494 = vrot.lane.b32.xlu0 %v482, 96
          %v495 = vpop.permute.xlu0 %494
          %496 = vrot.lane.b32.xlu0 %v483, 96
          %v497 = vpop.permute.xlu0 %496
          %498 = vrot.lane.b32.xlu0 %v484, 96
          %v499 = vpop.permute.xlu0 %498
          %500 = vrot.lane.b32.xlu0 %v485, 96
          %v501 = vpop.permute.xlu0 %500
          %506 = vrot.lane.b32.xlu0 %v489, 96
          %v507 = vpop.permute.xlu0 %506
          %vm509 = vcmask 261120
          %v511 = vsel %vm509, %v487, 0
          %513 = vmatpush.msra.mxu0 0.0
          %514 = vmatpush.msra.mxu0 0.0
          %515 = vmatpush.msra.mxu0 0.0
          %516 = vmatpush.msra.mxu0 0.0
          %517 = vmatpush.msra.mxu0 0.0
          %518 = vmatpush.msra.mxu0 0.0
          %519 = vmatpush.msra.mxu0 0.0
          %520 = vmatpush.msra.mxu0 0.0
          %521 = vmatpush.msra.mxu0 0.0
          %522 = vmatpush.msra.mxu0 0.0
          %523 = vmatpush.msra.mxu0 0.0
          %524 = vmatpush.msra.mxu0 0.0
          %525 = vmatpush.msra.mxu0 %v501
          %526 = vmatpush.msra.mxu0 %v499
          %527 = vmatpush.msra.mxu0 %v497
          %528 = vmatpush.msra.mxu0 %v495
          %529 = vmatmul.f32.gmra.mxu0 %v511
          %v530 = vpop.f32.mrf.mxu0
          %v531 = vadd.f32 %v507, %v530
          %532 = vdwg.mxu0
          %533 = vst.msk [vmem:[#allocation2] sm:$0xff] %vm509, %v531
          %535 = vrot.lane.b32.xlu0 %v531, 96
          %v536 = vpop.permute.xlu0 %535
          %538 = vst.msk [vmem:[#allocation3] sm:$0xff] %vm509, %v536
        $region80: #{tpu_custom_call.1} parent=55 // pred_fallthru
          _
        %v539 = vld [vmem:[%s402] sm:$0xff]
        %v540 = vld [vmem:[#allocation10] sm:$0xff]
        %v541 = vld [vmem:[#allocation10 + $0x8] sm:$0xff]
        %v542 = vld [vmem:[#allocation10 + $0x10] sm:$0xff]
        %v543 = vld [vmem:[#allocation10 + $0x18] sm:$0xff]
        %v544 = vld [vmem:[%s4] sm:$0x1]
        %v546 = vperm.slane %v544, 0
        %vm548 = vcmask 261120
        %v550 = vsel %vm548, %v539, 0
        %552 = vmatpush.msra.mxu0 0.0
        %553 = vmatpush.msra.mxu0 0.0
        %554 = vmatpush.msra.mxu0 0.0
        %555 = vmatpush.msra.mxu0 0.0
        %556 = vmatpush.msra.mxu0 0.0
        %557 = vmatpush.msra.mxu0 0.0
        %558 = vmatpush.msra.mxu0 0.0
        %559 = vmatpush.msra.mxu0 0.0
        %560 = vmatpush.msra.mxu0 0.0
        %561 = vmatpush.msra.mxu0 0.0
        %562 = vmatpush.msra.mxu0 0.0
        %563 = vmatpush.msra.mxu0 0.0
        %564 = vmatpush.msra.mxu0 %v543
        %565 = vmatpush.msra.mxu0 %v542
        %566 = vmatpush.msra.mxu0 %v541
        %567 = vmatpush.msra.mxu0 %v540
        %568 = vmatmul.f32.gmra.mxu0 %v550
        %v569 = vpop.f32.mrf.mxu0
        %v570 = vadd.f32 %v546, %v569
        %571 = vdwg.mxu0
        %v572 = vmul.f32 %v570, 0.35355338
        %v573 = vld [vmem:[#allocation2] sm:$0xff]
        %v574 = vld [vmem:[#allocation3] sm:$0xff]
        %v575 = vld [vmem:[%s422] sm:$0xff]
        %vm576 = vcmask 64512
        %v578 = vsel %vm576, %v572, 0
        %v581 = vsel %vm576, %v573, 0
        %583 = vmatpush.xpose.msra.mxu0 0.0
        %584 = vmatpush.xpose.msra.mxu0 0.0
        %585 = vmatpush.xpose.msra.mxu0 0.0
        %586 = vmatpush.xpose.msra.mxu0 0.0
        %587 = vmatpush.xpose.msra.mxu0 0.0
        %588 = vmatpush.xpose.msra.mxu0 0.0
        %589 = vmatpush.xpose.msra.mxu0 0.0
        %590 = vmatpush.xpose.msra.mxu0 0.0
        %591 = vmatpush.xpose.msra.mxu0 0.0
        %592 = vmatpush.xpose.msra.mxu0 0.0
        %593 = vmatpush.xpose.msra.mxu0 0.0
        %594 = vmatpush.xpose.msra.mxu0 0.0
        %595 = vmatpush.xpose.msra.mxu0 0.0
        %596 = vmatpush.xpose.msra.mxu0 0.0
        %597 = vmatpush.xpose.msra.mxu0 0.0
        %598 = vmatpush.xpose.msra.mxu0 %v581
        %599 = vmatmul.f32.gmra.mxu0 %v578
        %v600 = vpop.f32.mrf.mxu0
        %v601 = vadd.f32 %v575, %v600
        %602 = vdwg.mxu0
        %v603 = vsel %vm576, %v601, -inf
        %604 = vmax.xlane.f32.xlu0 %v603
        %v605 = vpop.xlane.xlu0 %604
        %v606 = vsub.f32 %v601, %v605
        %v607 = vmul.f32 %v606, 1.442695
        %v608 = vpow.pop %v607
        %v609 = vsel %vm576, %v608, 0.0
        %610 = vadd.xlane.f32.xlu0 %v609
        %v611 = vpop.xlane.xlu0 %610
        %v612 = vrcp.pop %v611
        %v613 = vmul.f32 %v608, %v612
        %v615 = vsel %vm576, %v613, 0
        %617 = vmatpush.msra.mxu0 0.0
        %618 = vmatpush.msra.mxu0 0.0
        %619 = vmatpush.msra.mxu0 0.0
        %620 = vmatpush.msra.mxu0 0.0
        %621 = vmatpush.msra.mxu0 0.0
        %622 = vmatpush.msra.mxu0 0.0
        %623 = vmatpush.msra.mxu0 0.0
        %624 = vmatpush.msra.mxu0 0.0
        %625 = vmatpush.msra.mxu0 0.0
        %626 = vmatpush.msra.mxu0 0.0
        %627 = vmatpush.msra.mxu0 0.0
        %628 = vmatpush.msra.mxu0 0.0
        %629 = vmatpush.msra.mxu0 0.0
        %630 = vmatpush.msra.mxu0 0.0
        %631 = vmatpush.msra.mxu0 0.0
        %632 = vmatpush.msra.mxu0 %v574
        %633 = vmatmul.f32.gmra.mxu0 %v615
        %v634 = vpop.f32.mrf.mxu0
        %v635 = vadd.f32 0.0, %v634
        %636 = vdwg.mxu0
        %637 = vrot.lane.b32.xlu0 %v572, 120
        %v638 = vpop.permute.xlu0 %637
        %639 = vrot.lane.b32.xlu0 %v573, 120
        %v640 = vpop.permute.xlu0 %639
        %v641 = vsel %vm576, %v638, 0
        %v643 = vsel %vm576, %v640, 0
        %645 = vmatpush.xpose.msra.mxu0 0.0
        %646 = vmatpush.xpose.msra.mxu0 0.0
        %647 = vmatpush.xpose.msra.mxu0 0.0
        %648 = vmatpush.xpose.msra.mxu0 0.0
        %649 = vmatpush.xpose.msra.mxu0 0.0
        %650 = vmatpush.xpose.msra.mxu0 0.0
        %651 = vmatpush.xpose.msra.mxu0 0.0
        %652 = vmatpush.xpose.msra.mxu0 0.0
        %653 = vmatpush.xpose.msra.mxu0 0.0
        %654 = vmatpush.xpose.msra.mxu0 0.0
        %655 = vmatpush.xpose.msra.mxu0 0.0
        %656 = vmatpush.xpose.msra.mxu0 0.0
        %657 = vmatpush.xpose.msra.mxu0 0.0
        %658 = vmatpush.xpose.msra.mxu0 0.0
        %659 = vmatpush.xpose.msra.mxu0 0.0
        %660 = vmatpush.xpose.msra.mxu0 %v643
        %661 = vmatmul.f32.gmra.mxu0 %v641
        %v662 = vpop.f32.mrf.mxu0
        %v663 = vadd.f32 %v575, %v662
        %664 = vdwg.mxu0
        %v665 = vsel %vm576, %v663, -inf
        %666 = vmax.xlane.f32.xlu0 %v665
        %v667 = vpop.xlane.xlu0 %666
        %v668 = vsub.f32 %v663, %v667
        %v669 = vmul.f32 %v668, 1.442695
        %v670 = vpow.pop %v669
        %v671 = vsel %vm576, %v670, 0.0
        %672 = vadd.xlane.f32.xlu0 %v671
        %v673 = vpop.xlane.xlu0 %672
        %v674 = vrcp.pop %v673
        %v675 = vmul.f32 %v670, %v674
        %677 = vrot.lane.b32.xlu0 %v574, 120
        %v678 = vpop.permute.xlu0 %677
        %v681 = vsel %vm576, %v675, 0
        %683 = vmatpush.msra.mxu0 0.0
        %684 = vmatpush.msra.mxu0 0.0
        %685 = vmatpush.msra.mxu0 0.0
        %686 = vmatpush.msra.mxu0 0.0
        %687 = vmatpush.msra.mxu0 0.0
        %688 = vmatpush.msra.mxu0 0.0
        %689 = vmatpush.msra.mxu0 0.0
        %690 = vmatpush.msra.mxu0 0.0
        %691 = vmatpush.msra.mxu0 0.0
        %692 = vmatpush.msra.mxu0 0.0
        %693 = vmatpush.msra.mxu0 0.0
        %694 = vmatpush.msra.mxu0 0.0
        %695 = vmatpush.msra.mxu0 0.0
        %696 = vmatpush.msra.mxu0 0.0
        %697 = vmatpush.msra.mxu0 0.0
        %698 = vmatpush.msra.mxu0 %v678
        %699 = vmatmul.f32.gmra.mxu0 %v681
        %v700 = vpop.f32.mrf.mxu0
        %v701 = vadd.f32 0.0, %v700
        %702 = vdwg.mxu0
        %703 = vrot.lane.b32.xlu0 %v572, 112
        %v704 = vpop.permute.xlu0 %703
        %705 = vrot.lane.b32.xlu0 %v573, 112
        %v706 = vpop.permute.xlu0 %705
        %v707 = vsel %vm576, %v704, 0
        %v709 = vsel %vm576, %v706, 0
        %711 = vmatpush.xpose.msra.mxu0 0.0
        %712 = vmatpush.xpose.msra.mxu0 0.0
        %713 = vmatpush.xpose.msra.mxu0 0.0
        %714 = vmatpush.xpose.msra.mxu0 0.0
        %715 = vmatpush.xpose.msra.mxu0 0.0
        %716 = vmatpush.xpose.msra.mxu0 0.0
        %717 = vmatpush.xpose.msra.mxu0 0.0
        %718 = vmatpush.xpose.msra.mxu0 0.0
        %719 = vmatpush.xpose.msra.mxu0 0.0
        %720 = vmatpush.xpose.msra.mxu0 0.0
        %721 = vmatpush.xpose.msra.mxu0 0.0
        %722 = vmatpush.xpose.msra.mxu0 0.0
        %723 = vmatpush.xpose.msra.mxu0 0.0
        %724 = vmatpush.xpose.msra.mxu0 0.0
        %725 = vmatpush.xpose.msra.mxu0 0.0
        %726 = vmatpush.xpose.msra.mxu0 %v709
        %727 = vmatmul.f32.gmra.mxu0 %v707
        %v728 = vpop.f32.mrf.mxu0
        %v729 = vadd.f32 %v575, %v728
        %730 = vdwg.mxu0
        %v731 = vsel %vm576, %v729, -inf
        %732 = vmax.xlane.f32.xlu0 %v731
        %v733 = vpop.xlane.xlu0 %732
        %v734 = vsub.f32 %v729, %v733
        %v735 = vmul.f32 %v734, 1.442695
        %v736 = vpow.pop %v735
        %v737 = vsel %vm576, %v736, 0.0
        %738 = vadd.xlane.f32.xlu0 %v737
        %v739 = vpop.xlane.xlu0 %738
        %v740 = vrcp.pop %v739
        %v741 = vmul.f32 %v736, %v740
        %742 = vrot.lane.b32.xlu0 %v574, 112
        %v743 = vpop.permute.xlu0 %742
        %v746 = vsel %vm576, %v741, 0
        %748 = vmatpush.msra.mxu0 0.0
        %749 = vmatpush.msra.mxu0 0.0
        %750 = vmatpush.msra.mxu0 0.0
        %751 = vmatpush.msra.mxu0 0.0
        %752 = vmatpush.msra.mxu0 0.0
        %753 = vmatpush.msra.mxu0 0.0
        %754 = vmatpush.msra.mxu0 0.0
        %755 = vmatpush.msra.mxu0 0.0
        %756 = vmatpush.msra.mxu0 0.0
        %757 = vmatpush.msra.mxu0 0.0
        %758 = vmatpush.msra.mxu0 0.0
        %759 = vmatpush.msra.mxu0 0.0
        %760 = vmatpush.msra.mxu0 0.0
        %761 = vmatpush.msra.mxu0 0.0
        %762 = vmatpush.msra.mxu0 0.0
        %763 = vmatpush.msra.mxu0 %v743
        %764 = vmatmul.f32.gmra.mxu0 %v746
        %v765 = vpop.f32.mrf.mxu0
        %v766 = vadd.f32 0.0, %v765
        %767 = vdwg.mxu0
        %768 = vrot.lane.b32.xlu0 %v572, 104
        %v769 = vpop.permute.xlu0 %768
        %770 = vrot.lane.b32.xlu0 %v573, 104
        %v771 = vpop.permute.xlu0 %770
        %v772 = vsel %vm576, %v769, 0
        %v774 = vsel %vm576, %v771, 0
        %776 = vmatpush.xpose.msra.mxu0 0.0
        %777 = vmatpush.xpose.msra.mxu0 0.0
        %778 = vmatpush.xpose.msra.mxu0 0.0
        %779 = vmatpush.xpose.msra.mxu0 0.0
        %780 = vmatpush.xpose.msra.mxu0 0.0
        %781 = vmatpush.xpose.msra.mxu0 0.0
        %782 = vmatpush.xpose.msra.mxu0 0.0
        %783 = vmatpush.xpose.msra.mxu0 0.0
        %784 = vmatpush.xpose.msra.mxu0 0.0
        %785 = vmatpush.xpose.msra.mxu0 0.0
        %786 = vmatpush.xpose.msra.mxu0 0.0
        %787 = vmatpush.xpose.msra.mxu0 0.0
        %788 = vmatpush.xpose.msra.mxu0 0.0
        %789 = vmatpush.xpose.msra.mxu0 0.0
        %790 = vmatpush.xpose.msra.mxu0 0.0
        %791 = vmatpush.xpose.msra.mxu0 %v774
        %792 = vmatmul.f32.gmra.mxu0 %v772
        %v793 = vpop.f32.mrf.mxu0
        %v794 = vadd.f32 %v575, %v793
        %795 = vdwg.mxu0
        %v796 = vsel %vm576, %v794, -inf
        %797 = vmax.xlane.f32.xlu0 %v796
        %v798 = vpop.xlane.xlu0 %797
        %v799 = vsub.f32 %v794, %v798
        %v800 = vmul.f32 %v799, 1.442695
        %v801 = vpow.pop %v800
        %v802 = vsel %vm576, %v801, 0.0
        %803 = vadd.xlane.f32.xlu0 %v802
        %v804 = vpop.xlane.xlu0 %803
        %v805 = vrcp.pop %v804
        %v806 = vmul.f32 %v801, %v805
        %807 = vrot.lane.b32.xlu0 %v574, 104
        %v808 = vpop.permute.xlu0 %807
        %v811 = vsel %vm576, %v806, 0
        %813 = vmatpush.msra.mxu0 0.0
        %814 = vmatpush.msra.mxu0 0.0
        %815 = vmatpush.msra.mxu0 0.0
        %816 = vmatpush.msra.mxu0 0.0
        %817 = vmatpush.msra.mxu0 0.0
        %818 = vmatpush.msra.mxu0 0.0
        %819 = vmatpush.msra.mxu0 0.0
        %820 = vmatpush.msra.mxu0 0.0
        %821 = vmatpush.msra.mxu0 0.0
        %822 = vmatpush.msra.mxu0 0.0
        %823 = vmatpush.msra.mxu0 0.0
        %824 = vmatpush.msra.mxu0 0.0
        %825 = vmatpush.msra.mxu0 0.0
        %826 = vmatpush.msra.mxu0 0.0
        %827 = vmatpush.msra.mxu0 0.0
        %828 = vmatpush.msra.mxu0 %v808
        %829 = vmatmul.f32.gmra.mxu0 %v811
        %v830 = vpop.f32.mrf.mxu0
        %v831 = vadd.f32 0.0, %v830
        %832 = vdwg.mxu0
        %834 = vrot.lane.b32.xlu0 %v701, 8
        %v835 = vpop.permute.xlu0 %834
        %838 = vrot.lane.b32.xlu0 %v766, 16
        %v839 = vpop.permute.xlu0 %838
        %842 = vrot.lane.b32.xlu0 %v831, 24
        %v843 = vpop.permute.xlu0 %842
        %v845 = vsel %vm576, %v635, %v835
        %vm846 = vcmask 130048
        %v847 = vsel %vm846, %v845, %v839
        %vm848 = vcmask 195584
        %v849 = vsel %vm848, %v847, %v843
        %v850 = vld [vmem:[#allocation12] sm:$0xff]
        %v851 = vld [vmem:[#allocation12 + $0x8] sm:$0xff]
        %v852 = vld [vmem:[#allocation12 + $0x10] sm:$0xff]
        %v853 = vld [vmem:[#allocation12 + $0x18] sm:$0xff]
        %v854 = vld [vmem:[%s6] sm:$0x1]
        %v856 = vperm.slane %v854, 0
        %v859 = vsel %vm548, %v849, 0
        %861 = vmatpush.msra.mxu0 0.0
        %862 = vmatpush.msra.mxu0 0.0
        %863 = vmatpush.msra.mxu0 0.0
        %864 = vmatpush.msra.mxu0 0.0
        %865 = vmatpush.msra.mxu0 0.0
        %866 = vmatpush.msra.mxu0 0.0
        %867 = vmatpush.msra.mxu0 0.0
        %868 = vmatpush.msra.mxu0 0.0
        %869 = vmatpush.msra.mxu0 0.0
        %870 = vmatpush.msra.mxu0 0.0
        %871 = vmatpush.msra.mxu0 0.0
        %872 = vmatpush.msra.mxu0 0.0
        %873 = vmatpush.msra.mxu0 %v853
        %874 = vmatpush.msra.mxu0 %v852
        %875 = vmatpush.msra.mxu0 %v851
        %876 = vmatpush.msra.mxu0 %v850
        %877 = vmatmul.f32.gmra.mxu0 %v859
        %v878 = vpop.f32.mrf.mxu0
        %v879 = vadd.f32 %v856, %v878
        %880 = vdwg.mxu0
        %v881 = vadd.f32 %v879, %v539
        %v882 = vld [vmem:[%s7] sm:$0x1]
        %v883 = vld [vmem:[%s8] sm:$0x1]
        %v884 = vsel %vm548, %v881, 0.0
        %885 = vadd.xlane.f32.xlu0 %v884
        %v886 = vpop.xlane.xlu0 %885
        %v887 = vrcp.pop 32.0
        %v888 = vmul.f32 32.0, %v887
        %v889 = vsub.f32 1.0, %v888
        %v890 = vmul.f32 %v887, %v889
        %v891 = vadd.f32 %v887, %v890
        %vm892 = vweird.f32 %v887
        %v893 = vsel %vm892, %v887, %v891
        %v894 = vmul.f32 %v886, %v893
        %v895 = vsub.f32 %v881, %v894
        %v896 = vmul.f32 %v895, %v895
        %v897 = vsel %vm548, %v896, 0.0
        %898 = vadd.xlane.f32.xlu0 %v897
        %v899 = vpop.xlane.xlu0 %898
        %v900 = vmul.f32 %v899, 0.032258064
        %v901 = vrsqrt.pop %v900
        %v902 = vmul.f32 %v901, %v900
        %v903 = vmul.f32 %v902, %v901
        %v904 = vmul.f32 0.5, %v903
        %v905 = vsub.f32 1.5, %v904
        %v906 = vmul.f32 %v901, %v905
        %v907 = vmul.f32 %v900, %v906
        %vm908 = vcmp.eq.f32.partialorder %v900, inf
        %v909 = vsel %vm908, %v900, %v907
        %vm910 = vcmp.eq.f32.partialorder %v900, 0.0
        %v911 = vand.u32 %v900, 2147483648
        %v912 = vsel %vm910, %v911, %v909
        %v914 = vperm.slane %v882, 0
        %v916 = vmul.f32 %v914, %v895
        %v917 = vadd.f32 %v912, 1e-06
        %v918 = vrcp.pop %v917
        %v919 = vmul.f32 %v917, %v918
        %v920 = vsub.f32 1.0, %v919
        %v921 = vmul.f32 %v918, %v920
        %v922 = vadd.f32 %v918, %v921
        %vm923 = vweird.f32 %v917
        %vm924 = vweird.f32 %v918
        %vm925 = vmor %vm923, %vm924
        %v926 = vsel %vm925, %v918, %v922
        %v927 = vand.u32 2147483647, %v917
        %vm928 = vcmp.eq.f32.partialorder %v927, 8.507059e+37
        %v929 = vand.u32 %v917, 2147483648
        %v930 = vor.u32 1.1754944e-38, %v929
        %v931 = vsel %vm928, %v930, %v926
        %v932 = vmul.f32 %v916, %v931
        %v934 = vperm.slane %v883, 0
        %v936 = vadd.f32 %v932, %v934
        %937 = vst.msk [vmem:[%s477] sm:$0xff] %vm548, %v936
        %s938 = sand.u32 %s260, 1
        %s939 = scalar_lea.sflag [#allocation6], %s938
        %s940 = sand.u32 %s260, 1
        %s941 = smul.addr %s940, 8
        %s942 = scalar_lea.vmem [#allocation13], %s941
        // Predicated region
        $region81: #{tpu_custom_call.1} parent=55 // pred_check
          %p943 = pneg %p270
        $region82: #{tpu_custom_call.1} parent=55 // pred_check_branch
          %945 = sbr.rel (%p943) target = $region84
        $region83: #{tpu_custom_call.1} parent=55 // pred_region
          %947 = vsyncadd %s939, 0
          %s948 = sadd.s32 %s35, %s34
          %s949 = smul.addr %s948, 8
          %s950 = scalar_lea.hbm %s9, %s949
          %s952 = sshll.u32 %s942, 4
          %s953 = int_to_ptr.vmem [resolvable:$true] %s952
          %s954 = sshll.u32 %s950, 4
          %s955 = int_to_ptr.hbm [resolvable:$true] %s954
          %957 = dma.vmem_to_hbm [thread:$0]  %s953, 128, %s955, %s939
        $region84: #{tpu_custom_call.1} parent=55 // pred_fallthru
          _
      $region56: #{tpu_custom_call.1} parent=5 // pred_fallthru
        _
      %p958 = scmp.le.s32.totalorder 2, %s25
      // Predicated region
      $region85: #{tpu_custom_call.1} parent=5 // pred_check
        %p959 = pneg %p958
      $region86: #{tpu_custom_call.1} parent=5 // pred_check_branch
        %961 = sbr.rel (%p959) target = $region88
      $region87: #{tpu_custom_call.1} parent=5 // pred_region
        %s962 = ssub.s32 %s25, 2
        // Predicated region
        $region89: #{tpu_custom_call.1} parent=87 // pred_check
          %p963 = pneg %p276
        $region90: #{tpu_custom_call.1} parent=87 // pred_check_branch
          %965 = sbr.rel (%p963) target = $region92
        $region91: #{tpu_custom_call.1} parent=87 // pred_region
          %s966 = sand.u32 %s261, 1
          %s967 = scalar_lea.sflag [#allocation6], %s966
          %s968 = sand.u32 %s261, 1
          %s969 = smul.addr %s968, 8
          %s970 = scalar_lea.vmem [#allocation13], %s969
          %972 = dma.done %s967, 128
        $region92: #{tpu_custom_call.1} parent=87 // pred_fallthru
          _
      $region88: #{tpu_custom_call.1} parent=5 // pred_fallthru
        _
    $region6: #{tpu_custom_call.1} parent=1 // loop_footer
      %s29 = sadd.s32 1, %s25
    $region7: #{tpu_custom_call.1} parent=1 // loop_footer_branch
      %24 = sbr.rel target = $region3
    $region8: #{tpu_custom_call.1} parent=1 // loop_exit
      _
    %973 = vsyncpa [#allocation5], 1
    %s974 = scalar_lea.sflag [#allocation5], 1
    %975 = vsyncpa %s974, 1
    %976 = vsyncpa [#allocation8], 1
    %s977 = scalar_lea.sflag [#allocation8], 1
    %978 = vsyncpa %s977, 1
    %979 = vsyncpa [#allocation11], 1
    %980 = vsyncpa [#allocation6], 1
    %s981 = scalar_lea.sflag [#allocation6], 1
    %982 = vsyncpa %s981, 1

</llo_original>
